<compile_context>
chip_gen: v7x
topology: tpu7x:2x2x1
jax: 0.10.0
libtpu: 0.0.40
codegen_flags: <defaults>
</compile_context>

<pallas_src>
import functools

import jax
import jax.numpy as jnp
from jax.experimental import pallas as pl
from jax.experimental.pallas import tpu as pltpu


def _round_up(x, m):
    return (x + m - 1) // m * m


# --------------------------------------------------------------------------
# Fused matmul kernel: out = A @ B + bias, optional ReLU.
# Grid = (Mp // tm,); K and N fit in a single block, so there is no reduction
# axis and no accumulator scratch (writes go directly to the output block).
# --------------------------------------------------------------------------
def _matmul_kernel(a_ref, b_ref, bias_ref, o_ref, *, relu):
    r = jnp.dot(a_ref[...], b_ref[...], preferred_element_type=jnp.float32)
    r = r + bias_ref[...]
    if relu:
        r = jnp.maximum(r, 0.0)
    o_ref[...] = r.astype(o_ref.dtype)


def matmul_fused(a, w_pad, bias_pad, *, relu):
    """a: (M, K) f32; w_pad: (Kp, Np) pre-padded weight; bias_pad: (1, Np).

    Returns the PADDED (Mp, Np) result; caller slices rows/cols as needed.
    Padded weight rows/cols and bias entries are zero, so padded output
    columns are exactly zero (also after ReLU).
    """
    M, K = a.shape
    Kp, Np = w_pad.shape
    assert Kp >= K and Kp % 128 == 0 and Np % 128 == 0

    # Whole-M block when small; otherwise tile M so multiple tiles exist
    # (lets the "parallel" axis use both TensorCores on v7x).
    tm = _round_up(M, 8) if M <= 512 else 512
    Mp = _round_up(M, tm)
    if (Mp, Kp) != (M, K):
        a = jnp.zeros((Mp, Kp), jnp.float32).at[:M, :K].set(a)

    grid = (Mp // tm,)
    cost = pl.CostEstimate(
        flops=2 * Mp * Kp * Np,
        transcendentals=0,
        bytes_accessed=4 * (Mp * Kp + Kp * Np + Mp * Np + Np),
    )
    return pl.pallas_call(
        functools.partial(_matmul_kernel, relu=relu),
        out_shape=jax.ShapeDtypeStruct((Mp, Np), jnp.float32),
        grid_spec=pltpu.PrefetchScalarGridSpec(
            num_scalar_prefetch=0,
            grid=grid,
            in_specs=[
                pl.BlockSpec((tm, Kp), lambda i: (i, 0)),
                pl.BlockSpec((Kp, Np), lambda i: (0, 0)),   # weight stays resident
                pl.BlockSpec((1, Np), lambda i: (0, 0)),
            ],
            out_specs=pl.BlockSpec((tm, Np), lambda i: (i, 0)),
        ),
        compiler_params=pltpu.CompilerParams(
            dimension_semantics=("parallel",)),
        cost_estimate=cost,
    )(a, w_pad, bias_pad)


# --------------------------------------------------------------------------
# MaxPool2d(kernel_size=2, stride=2): elementwise max of the 4 window views.
# Operates on the channel-padded (lane-dense, C = 128) NHWC tensor.
# --------------------------------------------------------------------------
def _max4_kernel(a_ref, b_ref, c_ref, d_ref, o_ref):
    o_ref[...] = jnp.maximum(jnp.maximum(a_ref[...], b_ref[...]),
                             jnp.maximum(c_ref[...], d_ref[...]))


def maxpool2x2(x_nhwc):
    B, H, W, C = x_nhwc.shape
    Ho, Wo = H // 2, W // 2
    # TODO(synk): the strided-window extraction is plain-JAX layout glue; the
    # reduction itself runs in the Pallas kernel with a lane-dense last dim.
    views = [x_nhwc[:, dh::2, dw::2, :].reshape(B * Ho * Wo, C)
             for dh in range(2) for dw in range(2)]
    out = pl.pallas_call(
        _max4_kernel,
        out_shape=jax.ShapeDtypeStruct((B * Ho * Wo, C), x_nhwc.dtype),
    )(*views)
    return out.reshape(B, Ho, Wo, C)


# --------------------------------------------------------------------------
# VALID (no-padding) stride-1 conv via im2col + fused Pallas matmul.
# --------------------------------------------------------------------------
def conv2d_valid(x_nhwc, w_pad, bias_pad, ksize, *, relu=True):
    """Returns NHWC output whose channel dim is padded to w_pad.shape[1]
    (multiple of 128); padded channels are exactly zero."""
    B, H, W, Cin = x_nhwc.shape
    kh = kw = ksize
    Ho, Wo = H - kh + 1, W - kw + 1
    patches = [x_nhwc[:, i:i + Ho, j:j + Wo, :]
               for i in range(kh) for j in range(kw)]
    cols = jnp.concatenate(patches, axis=-1).reshape(B * Ho * Wo, kh * kw * Cin)
    out = matmul_fused(cols, w_pad, bias_pad, relu=relu)
    Np = w_pad.shape[1]
    return out[:B * Ho * Wo].reshape(B, Ho, Wo, Np)


# --------------------------------------------------------------------------
# Parameters: PyTorch-layout init + one-time kernel-layout preparation.
# --------------------------------------------------------------------------
def init_params(key, num_classes=10):
    """PyTorch-layout params: Conv2d (Cout, Cin, kh, kw), Linear (out, in)."""
    specs = {
        "conv1": ((6, 3, 5, 5), (6,)),
        "conv2": ((16, 6, 5, 5), (16,)),
        "fc1": ((120, 16 * 5 * 5), (120,)),
        "fc2": ((84, 120), (84,)),
        "fc3": ((num_classes, 84), (num_classes,)),
    }
    params = {}
    for name, (ws, bs) in specs.items():
        key, k1, k2 = jax.random.split(key, 3)
        fan_in = 1
        for d in ws[1:]:
            fan_in *= d
        scale = 1.0 / (fan_in ** 0.5)
        params[name] = (
            jax.random.uniform(k1, ws, jnp.float32, -scale, scale),
            jax.random.uniform(k2, bs, jnp.float32, -scale, scale),
        )
    return params


def _pad_wb(wmat, b):
    K, N = wmat.shape
    Kp, Np = _round_up(K, 128), _round_up(N, 128)
    w_pad = jnp.zeros((Kp, Np), jnp.float32).at[:K, :N].set(wmat)
    b_pad = jnp.zeros((1, Np), jnp.float32).at[0, :N].set(b)
    return w_pad, b_pad


def prepare_params(params):
    """One-time layout pass: transpose + pad weights to (Kp, Np), biases to
    (1, Np).  Removes all per-forward transposes / padding of weights."""
    kp = {}
    for name in ("conv1", "conv2"):
        w, b = params[name]                               # (Cout, Cin, kh, kw)
        cout, cin, kh, kw = w.shape
        wmat = jnp.transpose(w, (2, 3, 1, 0)).reshape(kh * kw * cin, cout)
        kp[name] = _pad_wb(wmat, b)
    for name in ("fc1", "fc2", "fc3"):
        w, b = params[name]                               # (out, in)
        kp[name] = _pad_wb(w.T, b)                        # transposed once here
    return kp


# --------------------------------------------------------------------------
# Full forward pass (matches the PyTorch module's semantics).
# --------------------------------------------------------------------------
def cnn_forward(kparams, x_nchw):
    B = x_nchw.shape[0]
    x = jnp.transpose(x_nchw, (0, 2, 3, 1)).astype(jnp.float32)     # NHWC

    w, b = kparams["conv1"]
    x = conv2d_valid(x, w, b, 5, relu=True)          # (B, 28, 28, 128) [6 real]
    x = maxpool2x2(x)                                # (B, 14, 14, 128)
    x = x[..., :6]

    w, b = kparams["conv2"]
    x = conv2d_valid(x, w, b, 5, relu=True)          # (B, 10, 10, 128) [16 real]
    x = maxpool2x2(x)                                # (B,  5,  5, 128)
    x = x[..., :16]

    # Flatten exactly like torch.flatten(x, 1) on NCHW: channel-major.
    x = jnp.transpose(x, (0, 3, 1, 2)).reshape(B, 16 * 5 * 5)        # (B, 400)

    w, b = kparams["fc1"]
    x = matmul_fused(x, w, b, relu=True)             # (Mp, 128) [120 real]
    w, b = kparams["fc2"]
    x = matmul_fused(x, w, b, relu=True)             # (Mp, 128) [84 real]
    w, b = kparams["fc3"]
    x = matmul_fused(x, w, b, relu=False)            # (Mp, 128) [10 real]
    return x[:B, :10]


# --------------------------------------------------------------------------
# Pure-JAX reference (for a loose-tolerance correctness check).
# --------------------------------------------------------------------------
def reference_forward(params, x_nchw):
    def conv(x, w, b):
        y = jax.lax.conv_general_dilated(
            x, w, window_strides=(1, 1), padding="VALID",
            dimension_numbers=("NCHW", "OIHW", "NCHW"))
        return y + b[None, :, None, None]

    def pool(x):
        b_, c, h, w = x.shape
        return x.reshape(b_, c, h // 2, 2, w // 2, 2).max(axis=(3, 5))

    w, b = params["conv1"]; x = pool(jax.nn.relu(conv(x_nchw, w, b)))
    w, b = params["conv2"]; x = pool(jax.nn.relu(conv(x, w, b)))
    x = x.reshape(x.shape[0], -1)
    w, b = params["fc1"]; x = jax.nn.relu(x @ w.T + b)
    w, b = params["fc2"]; x = jax.nn.relu(x @ w.T + b)
    w, b = params["fc3"]; x = x @ w.T + b
    return x


if __name__ == "__main__":
    key = jax.random.PRNGKey(0)
    kx, kparam = jax.random.split(key)
    # fc1 expects 16*5*5 = 400 features -> 32x32 (CIFAR-10 sized) input.
    x = jax.random.normal(kx, (2, 3, 32, 32), dtype=jnp.float32)
    params = init_params(kparam, num_classes=10)
    kparams = prepare_params(params)          # one-time weight layout pass

    out = jax.jit(cnn_forward)(kparams, x)
    out = jax.block_until_ready(out)
    assert out.shape == (2, 10) and out.dtype == jnp.float32

    ref = reference_forward(params, x)
    assert jnp.allclose(out, ref, atol=5e-2, rtol=5e-2), float(
        jnp.max(jnp.abs(out - ref)))
    print("KERNEL_OK")
</pallas_src>

<mosaic_0001>
module attributes {stable_mosaic.version = 11 : i64} {
  func.func @_matmul_kernel(%arg0: i32, %arg1: memref<512x128xf32, #tpu.memory_space<vmem>>, %arg2: memref<128x128xf32, #tpu.memory_space<vmem>>, %arg3: memref<1x128xf32, #tpu.memory_space<vmem>>, %arg4: memref<512x128xf32, #tpu.memory_space<vmem>>) attributes {dimension_semantics = [#tpu.dimension_semantics<parallel>], iteration_bounds = array<i64: 4>, scalar_prefetch = 0 : i64, scratch_operands = 0 : i64, tpu.core_type = #tpu.core_type<tc>, window_params = [{transform_indices = @transform_0, window_bounds = array<i64: 512, 128>}, {pipeline_mode = #tpu.pipeline_mode<synchronous>, transform_indices = @transform_1, window_bounds = array<i64: 128, 128>}, {pipeline_mode = #tpu.pipeline_mode<synchronous>, transform_indices = @transform_2, window_bounds = array<i64: 1, 128>}, {transform_indices = @transform_3, window_bounds = array<i64: 512, 128>}]} {
    %c0 = arith.constant 0 : index
    %c0_0 = arith.constant 0 : index
    %0 = vector.load %arg1[%c0, %c0_0] : memref<512x128xf32, #tpu.memory_space<vmem>>, vector<512x128xf32>
    %c0_1 = arith.constant 0 : index
    %c0_2 = arith.constant 0 : index
    %1 = vector.load %arg2[%c0_1, %c0_2] : memref<128x128xf32, #tpu.memory_space<vmem>>, vector<128x128xf32>
    %cst = arith.constant dense<0.000000e+00> : vector<512x128xf32>
    %2 = tpu.matmul %0, %1, %cst {dimension_numbers = #tpu.dot_dimension_numbers<[1], [0], [0], [1], [0, 0, 1, 1], [], []>} : vector<512x128xf32>, vector<128x128xf32>, vector<512x128xf32> -> vector<512x128xf32>
    %c0_3 = arith.constant 0 : index
    %c0_4 = arith.constant 0 : index
    %3 = vector.load %arg3[%c0_3, %c0_4] : memref<1x128xf32, #tpu.memory_space<vmem>>, vector<1x128xf32>
    %4 = vector.broadcast %3 : vector<1x128xf32> to vector<512x128xf32>
    %5 = arith.addf %2, %4 : vector<512x128xf32>
    %cst_5 = arith.constant 0.000000e+00 : f32
    %6 = vector.broadcast %cst_5 : f32 to vector<512x128xf32>
    %7 = arith.maximumf %5, %6 : vector<512x128xf32>
    %c0_6 = arith.constant 0 : index
    %c0_7 = arith.constant 0 : index
    %8 = vector.load %arg4[%c0_6, %c0_7] : memref<512x128xf32, #tpu.memory_space<vmem>>, vector<512x128xf32>
    tpu.vector_store %arg4[%c0_6, %c0_7], %7 {strides = array<i32>} : memref<512x128xf32, #tpu.memory_space<vmem>>, vector<512x128xf32>,
    return
  }
  func.func @transform_0(%arg0: i32) -> (i32, i32) {
    %c0_i32 = arith.constant 0 : i32
    %c0_i32_0 = arith.constant 0 : i32
    return %arg0, %c0_i32 : i32, i32
  }
  func.func @transform_1(%arg0: i32) -> (i32, i32) {
    %c0_i32 = arith.constant 0 : i32
    %c0_i32_0 = arith.constant 0 : i32
    %c0_i32_1 = arith.constant 0 : i32
    return %c0_i32, %c0_i32_0 : i32, i32
  }
  func.func @transform_2(%arg0: i32) -> (i32, i32) {
    %c0_i32 = arith.constant 0 : i32
    %c0_i32_0 = arith.constant 0 : i32
    %c0_i32_1 = arith.constant 0 : i32
    return %c0_i32, %c0_i32_0 : i32, i32
  }
  func.func @transform_3(%arg0: i32) -> (i32, i32) {
    %c0_i32 = arith.constant 0 : i32
    %c0_i32_0 = arith.constant 0 : i32
    return %arg0, %c0_i32 : i32, i32
  }
}

module attributes {stable_mosaic.version = 11 : i64} {
  func.func @_max4_kernel(%arg0: memref<392x128xf32, #tpu.memory_space<vmem>>, %arg1: memref<392x128xf32, #tpu.memory_space<vmem>>, %arg2: memref<392x128xf32, #tpu.memory_space<vmem>>, %arg3: memref<392x128xf32, #tpu.memory_space<vmem>>, %arg4: memref<392x128xf32, #tpu.memory_space<vmem>>) attributes {dimension_semantics = [], scalar_prefetch = 0 : i64, scratch_operands = 0 : i64, tpu.core_type = #tpu.core_type<tc>} {
    %c0 = arith.constant 0 : index
    %c0_0 = arith.constant 0 : index
    %0 = vector.load %arg0[%c0, %c0_0] : memref<392x128xf32, #tpu.memory_space<vmem>>, vector<392x128xf32>
    %c0_1 = arith.constant 0 : index
    %c0_2 = arith.constant 0 : index
    %1 = vector.load %arg1[%c0_1, %c0_2] : memref<392x128xf32, #tpu.memory_space<vmem>>, vector<392x128xf32>
    %2 = arith.maximumf %0, %1 : vector<392x128xf32>
    %c0_3 = arith.constant 0 : index
    %c0_4 = arith.constant 0 : index
    %3 = vector.load %arg2[%c0_3, %c0_4] : memref<392x128xf32, #tpu.memory_space<vmem>>, vector<392x128xf32>
    %c0_5 = arith.constant 0 : index
    %c0_6 = arith.constant 0 : index
    %4 = vector.load %arg3[%c0_5, %c0_6] : memref<392x128xf32, #tpu.memory_space<vmem>>, vector<392x128xf32>
    %5 = arith.maximumf %3, %4 : vector<392x128xf32>
    %6 = arith.maximumf %2, %5 : vector<392x128xf32>
    %c0_7 = arith.constant 0 : index
    %c0_8 = arith.constant 0 : index
    %7 = vector.load %arg4[%c0_7, %c0_8] : memref<392x128xf32, #tpu.memory_space<vmem>>, vector<392x128xf32>
    tpu.vector_store %arg4[%c0_7, %c0_8], %6 {strides = array<i32>} : memref<392x128xf32, #tpu.memory_space<vmem>>, vector<392x128xf32>,
    return
  }
}

module attributes {stable_mosaic.version = 11 : i64} {
  func.func @_matmul_kernel(%arg0: i32, %arg1: memref<200x256xf32, #tpu.memory_space<vmem>>, %arg2: memref<256x128xf32, #tpu.memory_space<vmem>>, %arg3: memref<1x128xf32, #tpu.memory_space<vmem>>, %arg4: memref<200x128xf32, #tpu.memory_space<vmem>>) attributes {dimension_semantics = [#tpu.dimension_semantics<parallel>], iteration_bounds = array<i64: 1>, scalar_prefetch = 0 : i64, scratch_operands = 0 : i64, tpu.core_type = #tpu.core_type<tc>, window_params = [{transform_indices = @transform_0, window_bounds = array<i64: 200, 256>}, {pipeline_mode = #tpu.pipeline_mode<synchronous>, transform_indices = @transform_1, window_bounds = array<i64: 256, 128>}, {pipeline_mode = #tpu.pipeline_mode<synchronous>, transform_indices = @transform_2, window_bounds = array<i64: 1, 128>}, {transform_indices = @transform_3, window_bounds = array<i64: 200, 128>}]} {
    %c0 = arith.constant 0 : index
    %c0_0 = arith.constant 0 : index
    %0 = vector.load %arg1[%c0, %c0_0] : memref<200x256xf32, #tpu.memory_space<vmem>>, vector<200x256xf32>
    %c0_1 = arith.constant 0 : index
    %c0_2 = arith.constant 0 : index
    %1 = vector.load %arg2[%c0_1, %c0_2] : memref<256x128xf32, #tpu.memory_space<vmem>>, vector<256x128xf32>
    %cst = arith.constant dense<0.000000e+00> : vector<200x128xf32>
    %2 = tpu.matmul %0, %1, %cst {dimension_numbers = #tpu.dot_dimension_numbers<[1], [0], [0], [1], [0, 0, 1, 1], [], []>} : vector<200x256xf32>, vector<256x128xf32>, vector<200x128xf32> -> vector<200x128xf32>
    %c0_3 = arith.constant 0 : index
    %c0_4 = arith.constant 0 : index
    %3 = vector.load %arg3[%c0_3, %c0_4] : memref<1x128xf32, #tpu.memory_space<vmem>>, vector<1x128xf32>
    %4 = vector.broadcast %3 : vector<1x128xf32> to vector<200x128xf32>
    %5 = arith.addf %2, %4 : vector<200x128xf32>
    %cst_5 = arith.constant 0.000000e+00 : f32
    %6 = vector.broadcast %cst_5 : f32 to vector<200x128xf32>
    %7 = arith.maximumf %5, %6 : vector<200x128xf32>
    %c0_6 = arith.constant 0 : index
    %c0_7 = arith.constant 0 : index
    %8 = vector.load %arg4[%c0_6, %c0_7] : memref<200x128xf32, #tpu.memory_space<vmem>>, vector<200x128xf32>
    tpu.vector_store %arg4[%c0_6, %c0_7], %7 {strides = array<i32>} : memref<200x128xf32, #tpu.memory_space<vmem>>, vector<200x128xf32>,
    return
  }
  func.func @transform_0(%arg0: i32) -> (i32, i32) {
    %c0_i32 = arith.constant 0 : i32
    %c0_i32_0 = arith.constant 0 : i32
    return %arg0, %c0_i32 : i32, i32
  }
  func.func @transform_1(%arg0: i32) -> (i32, i32) {
    %c0_i32 = arith.constant 0 : i32
    %c0_i32_0 = arith.constant 0 : i32
    %c0_i32_1 = arith.constant 0 : i32
    return %c0_i32, %c0_i32_0 : i32, i32
  }
  func.func @transform_2(%arg0: i32) -> (i32, i32) {
    %c0_i32 = arith.constant 0 : i32
    %c0_i32_0 = arith.constant 0 : i32
    %c0_i32_1 = arith.constant 0 : i32
    return %c0_i32, %c0_i32_0 : i32, i32
  }
  func.func @transform_3(%arg0: i32) -> (i32, i32) {
    %c0_i32 = arith.constant 0 : i32
    %c0_i32_0 = arith.constant 0 : i32
    return %arg0, %c0_i32 : i32, i32
  }
}

module attributes {stable_mosaic.version = 11 : i64} {
  func.func @_max4_kernel(%arg0: memref<50x128xf32, #tpu.memory_space<vmem>>, %arg1: memref<50x128xf32, #tpu.memory_space<vmem>>, %arg2: memref<50x128xf32, #tpu.memory_space<vmem>>, %arg3: memref<50x128xf32, #tpu.memory_space<vmem>>, %arg4: memref<50x128xf32, #tpu.memory_space<vmem>>) attributes {dimension_semantics = [], scalar_prefetch = 0 : i64, scratch_operands = 0 : i64, tpu.core_type = #tpu.core_type<tc>} {
    %c0 = arith.constant 0 : index
    %c0_0 = arith.constant 0 : index
    %0 = vector.load %arg0[%c0, %c0_0] : memref<50x128xf32, #tpu.memory_space<vmem>>, vector<50x128xf32>
    %c0_1 = arith.constant 0 : index
    %c0_2 = arith.constant 0 : index
    %1 = vector.load %arg1[%c0_1, %c0_2] : memref<50x128xf32, #tpu.memory_space<vmem>>, vector<50x128xf32>
    %2 = arith.maximumf %0, %1 : vector<50x128xf32>
    %c0_3 = arith.constant 0 : index
    %c0_4 = arith.constant 0 : index
    %3 = vector.load %arg2[%c0_3, %c0_4] : memref<50x128xf32, #tpu.memory_space<vmem>>, vector<50x128xf32>
    %c0_5 = arith.constant 0 : index
    %c0_6 = arith.constant 0 : index
    %4 = vector.load %arg3[%c0_5, %c0_6] : memref<50x128xf32, #tpu.memory_space<vmem>>, vector<50x128xf32>
    %5 = arith.maximumf %3, %4 : vector<50x128xf32>
    %6 = arith.maximumf %2, %5 : vector<50x128xf32>
    %c0_7 = arith.constant 0 : index
    %c0_8 = arith.constant 0 : index
    %7 = vector.load %arg4[%c0_7, %c0_8] : memref<50x128xf32, #tpu.memory_space<vmem>>, vector<50x128xf32>
    tpu.vector_store %arg4[%c0_7, %c0_8], %6 {strides = array<i32>} : memref<50x128xf32, #tpu.memory_space<vmem>>, vector<50x128xf32>,
    return
  }
}

module attributes {stable_mosaic.version = 11 : i64} {
  func.func @_matmul_kernel(%arg0: i32, %arg1: memref<8x512xf32, #tpu.memory_space<vmem>>, %arg2: memref<512x128xf32, #tpu.memory_space<vmem>>, %arg3: memref<1x128xf32, #tpu.memory_space<vmem>>, %arg4: memref<8x128xf32, #tpu.memory_space<vmem>>) attributes {dimension_semantics = [#tpu.dimension_semantics<parallel>], iteration_bounds = array<i64: 1>, scalar_prefetch = 0 : i64, scratch_operands = 0 : i64, tpu.core_type = #tpu.core_type<tc>, window_params = [{transform_indices = @transform_0, window_bounds = array<i64: 8, 512>}, {pipeline_mode = #tpu.pipeline_mode<synchronous>, transform_indices = @transform_1, window_bounds = array<i64: 512, 128>}, {pipeline_mode = #tpu.pipeline_mode<synchronous>, transform_indices = @transform_2, window_bounds = array<i64: 1, 128>}, {transform_indices = @transform_3, window_bounds = array<i64: 8, 128>}]} {
    %c0 = arith.constant 0 : index
    %c0_0 = arith.constant 0 : index
    %0 = vector.load %arg1[%c0, %c0_0] : memref<8x512xf32, #tpu.memory_space<vmem>>, vector<8x512xf32>
    %c0_1 = arith.constant 0 : index
    %c0_2 = arith.constant 0 : index
    %1 = vector.load %arg2[%c0_1, %c0_2] : memref<512x128xf32, #tpu.memory_space<vmem>>, vector<512x128xf32>
    %cst = arith.constant dense<0.000000e+00> : vector<8x128xf32>
    %2 = tpu.matmul %0, %1, %cst {dimension_numbers = #tpu.dot_dimension_numbers<[1], [0], [0], [1], [0, 0, 1, 1], [], []>} : vector<8x512xf32>, vector<512x128xf32>, vector<8x128xf32> -> vector<8x128xf32>
    %c0_3 = arith.constant 0 : index
    %c0_4 = arith.constant 0 : index
    %3 = vector.load %arg3[%c0_3, %c0_4] : memref<1x128xf32, #tpu.memory_space<vmem>>, vector<1x128xf32>
    %4 = vector.broadcast %3 : vector<1x128xf32> to vector<8x128xf32>
    %5 = arith.addf %2, %4 : vector<8x128xf32>
    %cst_5 = arith.constant 0.000000e+00 : f32
    %6 = vector.broadcast %cst_5 : f32 to vector<8x128xf32>
    %7 = arith.maximumf %5, %6 : vector<8x128xf32>
    %c0_6 = arith.constant 0 : index
    %c0_7 = arith.constant 0 : index
    %8 = vector.load %arg4[%c0_6, %c0_7] : memref<8x128xf32, #tpu.memory_space<vmem>>, vector<8x128xf32>
    tpu.vector_store %arg4[%c0_6, %c0_7], %7 {strides = array<i32>} : memref<8x128xf32, #tpu.memory_space<vmem>>, vector<8x128xf32>,
    return
  }
  func.func @transform_0(%arg0: i32) -> (i32, i32) {
    %c0_i32 = arith.constant 0 : i32
    %c0_i32_0 = arith.constant 0 : i32
    return %arg0, %c0_i32 : i32, i32
  }
  func.func @transform_1(%arg0: i32) -> (i32, i32) {
    %c0_i32 = arith.constant 0 : i32
    %c0_i32_0 = arith.constant 0 : i32
    %c0_i32_1 = arith.constant 0 : i32
    return %c0_i32, %c0_i32_0 : i32, i32
  }
  func.func @transform_2(%arg0: i32) -> (i32, i32) {
    %c0_i32 = arith.constant 0 : i32
    %c0_i32_0 = arith.constant 0 : i32
    %c0_i32_1 = arith.constant 0 : i32
    return %c0_i32, %c0_i32_0 : i32, i32
  }
  func.func @transform_3(%arg0: i32) -> (i32, i32) {
    %c0_i32 = arith.constant 0 : i32
    %c0_i32_0 = arith.constant 0 : i32
    return %arg0, %c0_i32 : i32, i32
  }
}

module attributes {stable_mosaic.version = 11 : i64} {
  func.func @_matmul_kernel(%arg0: i32, %arg1: memref<8x128xf32, #tpu.memory_space<vmem>>, %arg2: memref<128x128xf32, #tpu.memory_space<vmem>>, %arg3: memref<1x128xf32, #tpu.memory_space<vmem>>, %arg4: memref<8x128xf32, #tpu.memory_space<vmem>>) attributes {dimension_semantics = [#tpu.dimension_semantics<parallel>], iteration_bounds = array<i64: 1>, scalar_prefetch = 0 : i64, scratch_operands = 0 : i64, tpu.core_type = #tpu.core_type<tc>, window_params = [{transform_indices = @transform_0, window_bounds = array<i64: 8, 128>}, {pipeline_mode = #tpu.pipeline_mode<synchronous>, transform_indices = @transform_1, window_bounds = array<i64: 128, 128>}, {pipeline_mode = #tpu.pipeline_mode<synchronous>, transform_indices = @transform_2, window_bounds = array<i64: 1, 128>}, {transform_indices = @transform_3, window_bounds = array<i64: 8, 128>}]} {
    %c0 = arith.constant 0 : index
    %c0_0 = arith.constant 0 : index
    %0 = vector.load %arg1[%c0, %c0_0] : memref<8x128xf32, #tpu.memory_space<vmem>>, vector<8x128xf32>
    %c0_1 = arith.constant 0 : index
    %c0_2 = arith.constant 0 : index
    %1 = vector.load %arg2[%c0_1, %c0_2] : memref<128x128xf32, #tpu.memory_space<vmem>>, vector<128x128xf32>
    %cst = arith.constant dense<0.000000e+00> : vector<8x128xf32>
    %2 = tpu.matmul %0, %1, %cst {dimension_numbers = #tpu.dot_dimension_numbers<[1], [0], [0], [1], [0, 0, 1, 1], [], []>} : vector<8x128xf32>, vector<128x128xf32>, vector<8x128xf32> -> vector<8x128xf32>
    %c0_3 = arith.constant 0 : index
    %c0_4 = arith.constant 0 : index
    %3 = vector.load %arg3[%c0_3, %c0_4] : memref<1x128xf32, #tpu.memory_space<vmem>>, vector<1x128xf32>
    %4 = vector.broadcast %3 : vector<1x128xf32> to vector<8x128xf32>
    %5 = arith.addf %2, %4 : vector<8x128xf32>
    %cst_5 = arith.constant 0.000000e+00 : f32
    %6 = vector.broadcast %cst_5 : f32 to vector<8x128xf32>
    %7 = arith.maximumf %5, %6 : vector<8x128xf32>
    %c0_6 = arith.constant 0 : index
    %c0_7 = arith.constant 0 : index
    %8 = vector.load %arg4[%c0_6, %c0_7] : memref<8x128xf32, #tpu.memory_space<vmem>>, vector<8x128xf32>
    tpu.vector_store %arg4[%c0_6, %c0_7], %7 {strides = array<i32>} : memref<8x128xf32, #tpu.memory_space<vmem>>, vector<8x128xf32>,
    return
  }
  func.func @transform_0(%arg0: i32) -> (i32, i32) {
    %c0_i32 = arith.constant 0 : i32
    %c0_i32_0 = arith.constant 0 : i32
    return %arg0, %c0_i32 : i32, i32
  }
  func.func @transform_1(%arg0: i32) -> (i32, i32) {
    %c0_i32 = arith.constant 0 : i32
    %c0_i32_0 = arith.constant 0 : i32
    %c0_i32_1 = arith.constant 0 : i32
    return %c0_i32, %c0_i32_0 : i32, i32
  }
  func.func @transform_2(%arg0: i32) -> (i32, i32) {
    %c0_i32 = arith.constant 0 : i32
    %c0_i32_0 = arith.constant 0 : i32
    %c0_i32_1 = arith.constant 0 : i32
    return %c0_i32, %c0_i32_0 : i32, i32
  }
  func.func @transform_3(%arg0: i32) -> (i32, i32) {
    %c0_i32 = arith.constant 0 : i32
    %c0_i32_0 = arith.constant 0 : i32
    return %arg0, %c0_i32 : i32, i32
  }
}

module attributes {stable_mosaic.version = 11 : i64} {
  func.func @_matmul_kernel(%arg0: i32, %arg1: memref<8x128xf32, #tpu.memory_space<vmem>>, %arg2: memref<128x128xf32, #tpu.memory_space<vmem>>, %arg3: memref<1x128xf32, #tpu.memory_space<vmem>>, %arg4: memref<8x128xf32, #tpu.memory_space<vmem>>) attributes {dimension_semantics = [#tpu.dimension_semantics<parallel>], iteration_bounds = array<i64: 1>, scalar_prefetch = 0 : i64, scratch_operands = 0 : i64, tpu.core_type = #tpu.core_type<tc>, window_params = [{transform_indices = @transform_0, window_bounds = array<i64: 8, 128>}, {pipeline_mode = #tpu.pipeline_mode<synchronous>, transform_indices = @transform_1, window_bounds = array<i64: 128, 128>}, {pipeline_mode = #tpu.pipeline_mode<synchronous>, transform_indices = @transform_2, window_bounds = array<i64: 1, 128>}, {transform_indices = @transform_3, window_bounds = array<i64: 8, 128>}]} {
    %c0 = arith.constant 0 : index
    %c0_0 = arith.constant 0 : index
    %0 = vector.load %arg1[%c0, %c0_0] : memref<8x128xf32, #tpu.memory_space<vmem>>, vector<8x128xf32>
    %c0_1 = arith.constant 0 : index
    %c0_2 = arith.constant 0 : index
    %1 = vector.load %arg2[%c0_1, %c0_2] : memref<128x128xf32, #tpu.memory_space<vmem>>, vector<128x128xf32>
    %cst = arith.constant dense<0.000000e+00> : vector<8x128xf32>
    %2 = tpu.matmul %0, %1, %cst {dimension_numbers = #tpu.dot_dimension_numbers<[1], [0], [0], [1], [0, 0, 1, 1], [], []>} : vector<8x128xf32>, vector<128x128xf32>, vector<8x128xf32> -> vector<8x128xf32>
    %c0_3 = arith.constant 0 : index
    %c0_4 = arith.constant 0 : index
    %3 = vector.load %arg3[%c0_3, %c0_4] : memref<1x128xf32, #tpu.memory_space<vmem>>, vector<1x128xf32>
    %4 = vector.broadcast %3 : vector<1x128xf32> to vector<8x128xf32>
    %5 = arith.addf %2, %4 : vector<8x128xf32>
    %c0_5 = arith.constant 0 : index
    %c0_6 = arith.constant 0 : index
    %6 = vector.load %arg4[%c0_5, %c0_6] : memref<8x128xf32, #tpu.memory_space<vmem>>, vector<8x128xf32>
    tpu.vector_store %arg4[%c0_5, %c0_6], %5 {strides = array<i32>} : memref<8x128xf32, #tpu.memory_space<vmem>>, vector<8x128xf32>,
    return
  }
  func.func @transform_0(%arg0: i32) -> (i32, i32) {
    %c0_i32 = arith.constant 0 : i32
    %c0_i32_0 = arith.constant 0 : i32
    return %arg0, %c0_i32 : i32, i32
  }
  func.func @transform_1(%arg0: i32) -> (i32, i32) {
    %c0_i32 = arith.constant 0 : i32
    %c0_i32_0 = arith.constant 0 : i32
    %c0_i32_1 = arith.constant 0 : i32
    return %c0_i32, %c0_i32_0 : i32, i32
  }
  func.func @transform_2(%arg0: i32) -> (i32, i32) {
    %c0_i32 = arith.constant 0 : i32
    %c0_i32_0 = arith.constant 0 : i32
    %c0_i32_1 = arith.constant 0 : i32
    return %c0_i32, %c0_i32_0 : i32, i32
  }
  func.func @transform_3(%arg0: i32) -> (i32, i32) {
    %c0_i32 = arith.constant 0 : i32
    %c0_i32_0 = arith.constant 0 : i32
    return %arg0, %c0_i32 : i32, i32
  }
}

</mosaic_0001>

<llo_original>
// kernel: cnn_forward.8
$region0: #{cnn_forward.8}
  #allocation0 [shape = 'u32[]', space=smem, size = 0x4, offset = 0x4, fixed_abs, tag = 'smem constant byte address 0x4 - core index']
  #allocation1 [shape = 'u32[144,128]{1,0:T(1,128)}', space=vmem, size = 0x12000, scoped, tag = 'internal scratch']
  %s0 = inlined_call_operand.vmem [shape: f32[392,128], index: 0, kind: input, shape index: {}]
  %s1 = inlined_call_operand.vmem [shape: f32[392,128], index: 1, kind: input, shape index: {}]
  %s2 = inlined_call_operand.vmem [shape: f32[392,128], index: 2, kind: input, shape index: {}]
  %s3 = inlined_call_operand.vmem [shape: f32[392,128], index: 3, kind: input, shape index: {}]
  %s4 = inlined_call_operand.vmem [shape: f32[392,128], index: 4, kind: output, shape index: {}]
  %s5 = sld [smem:[#allocation0]]
  $region26: #{cnn_forward.8} parent=0
    _
  %s7 = ssub.s32 1, %s5
  %s8 = scalar_select 0, %s7, %s5
  // Predicated region
  $region2: #{cnn_forward.8} parent=0 // pred_check
    _
  $region3: #{cnn_forward.8} parent=0 // pred_check_branch
    %10 = sbr.rel (0) target = $region5
  $region4: #{cnn_forward.8} parent=0 // pred_region
    _
  $region5: #{cnn_forward.8} parent=0 // pred_fallthru
    _
  // Predicated region
  $region6: #{cnn_forward.8} parent=0 // pred_check
    _
  $region7: #{cnn_forward.8} parent=0 // pred_check_branch
    %12 = sbr.rel (0) target = $region9
  $region8: #{cnn_forward.8} parent=0 // pred_region
    _
  $region9: #{cnn_forward.8} parent=0 // pred_fallthru
    _
  // Predicated region
  $region10: #{cnn_forward.8} parent=0 // pred_check
    _
  $region11: #{cnn_forward.8} parent=0 // pred_check_branch
    %14 = sbr.rel (0) target = $region13
  $region12: #{cnn_forward.8} parent=0 // pred_region
    _
  $region13: #{cnn_forward.8} parent=0 // pred_fallthru
    _
  // Predicated region
  $region14: #{cnn_forward.8} parent=0 // pred_check
    _
  $region15: #{cnn_forward.8} parent=0 // pred_check_branch
    %16 = sbr.rel (0) target = $region17
  $region16: #{cnn_forward.8} parent=0 // pred_region
    _
  $region17: #{cnn_forward.8} parent=0 // pred_fallthru
    _
  %v17 = vld [vmem:[%s0] sm:$0xff]
  %v18 = vld [vmem:[%s0 + $0x8] sm:$0xff]
  %v19 = vld [vmem:[%s0 + $0x10] sm:$0xff]
  %v20 = vld [vmem:[%s0 + $0x18] sm:$0xff]
  %v21 = vld [vmem:[%s0 + $0x20] sm:$0xff]
  %v22 = vld [vmem:[%s0 + $0x28] sm:$0xff]
  %v23 = vld [vmem:[%s0 + $0x30] sm:$0xff]
  %v24 = vld [vmem:[%s0 + $0x38] sm:$0xff]
  %v25 = vld [vmem:[%s0 + $0x40] sm:$0xff]
  %v26 = vld [vmem:[%s0 + $0x48] sm:$0xff]
  %v27 = vld [vmem:[%s0 + $0x50] sm:$0xff]
  %v28 = vld [vmem:[%s0 + $0x58] sm:$0xff]
  %v29 = vld [vmem:[%s0 + $0x60] sm:$0xff]
  %v30 = vld [vmem:[%s0 + $0x68] sm:$0xff]
  %v31 = vld [vmem:[%s0 + $0x70] sm:$0xff]
  %v32 = vld [vmem:[%s0 + $0x78] sm:$0xff]
  %v33 = vld [vmem:[%s0 + $0x80] sm:$0xff]
  %v34 = vld [vmem:[%s0 + $0x88] sm:$0xff]
  %v35 = vld [vmem:[%s0 + $0x90] sm:$0xff]
  %v36 = vld [vmem:[%s0 + $0x98] sm:$0xff]
  %v37 = vld [vmem:[%s0 + $0xa0] sm:$0xff]
  %v38 = vld [vmem:[%s0 + $0xa8] sm:$0xff]
  %v39 = vld [vmem:[%s0 + $0xb0] sm:$0xff]
  %v40 = vld [vmem:[%s0 + $0xb8] sm:$0xff]
  %v41 = vld [vmem:[%s0 + $0xc0] sm:$0xff]
  %v42 = vld [vmem:[%s0 + $0xc8] sm:$0xff]
  %v43 = vld [vmem:[%s0 + $0xd0] sm:$0xff]
  %v44 = vld [vmem:[%s0 + $0xd8] sm:$0xff]
  %v45 = vld [vmem:[%s0 + $0xe0] sm:$0xff]
  %v46 = vld [vmem:[%s0 + $0xe8] sm:$0xff]
  %v47 = vld [vmem:[%s0 + $0xf0] sm:$0xff]
  %v48 = vld [vmem:[%s0 + $0xf8] sm:$0xff]
  %v49 = vld [vmem:[%s0 + $0x100] sm:$0xff]
  %v50 = vld [vmem:[%s0 + $0x108] sm:$0xff]
  %v51 = vld [vmem:[%s0 + $0x110] sm:$0xff]
  %v52 = vld [vmem:[%s0 + $0x118] sm:$0xff]
  %v53 = vld [vmem:[%s0 + $0x120] sm:$0xff]
  %v54 = vld [vmem:[%s0 + $0x128] sm:$0xff]
  %v55 = vld [vmem:[%s0 + $0x130] sm:$0xff]
  %v56 = vld [vmem:[%s0 + $0x138] sm:$0xff]
  %v57 = vld [vmem:[%s0 + $0x140] sm:$0xff]
  %v58 = vld [vmem:[%s0 + $0x148] sm:$0xff]
  %v59 = vld [vmem:[%s0 + $0x150] sm:$0xff]
  %v60 = vld [vmem:[%s0 + $0x158] sm:$0xff]
  %v61 = vld [vmem:[%s0 + $0x160] sm:$0xff]
  %v62 = vld [vmem:[%s0 + $0x168] sm:$0xff]
  %v63 = vld [vmem:[%s0 + $0x170] sm:$0xff]
  %v64 = vld [vmem:[%s0 + $0x178] sm:$0xff]
  %v65 = vld [vmem:[%s0 + $0x180] sm:$0xff]
  %v66 = vld [vmem:[%s1] sm:$0xff]
  %v67 = vld [vmem:[%s1 + $0x8] sm:$0xff]
  %v68 = vld [vmem:[%s1 + $0x10] sm:$0xff]
  %v69 = vld [vmem:[%s1 + $0x18] sm:$0xff]
  %v70 = vld [vmem:[%s1 + $0x20] sm:$0xff]
  %v71 = vld [vmem:[%s1 + $0x28] sm:$0xff]
  %v72 = vld [vmem:[%s1 + $0x30] sm:$0xff]
  %v73 = vld [vmem:[%s1 + $0x38] sm:$0xff]
  %v74 = vld [vmem:[%s1 + $0x40] sm:$0xff]
  %v75 = vld [vmem:[%s1 + $0x48] sm:$0xff]
  %v76 = vld [vmem:[%s1 + $0x50] sm:$0xff]
  %v77 = vld [vmem:[%s1 + $0x58] sm:$0xff]
  %v78 = vld [vmem:[%s1 + $0x60] sm:$0xff]
  %v79 = vld [vmem:[%s1 + $0x68] sm:$0xff]
  %v80 = vld [vmem:[%s1 + $0x70] sm:$0xff]
  %v81 = vld [vmem:[%s1 + $0x78] sm:$0xff]
  %v82 = vld [vmem:[%s1 + $0x80] sm:$0xff]
  %v83 = vld [vmem:[%s1 + $0x88] sm:$0xff]
  %v84 = vld [vmem:[%s1 + $0x90] sm:$0xff]
  %v85 = vld [vmem:[%s1 + $0x98] sm:$0xff]
  %v86 = vld [vmem:[%s1 + $0xa0] sm:$0xff]
  %v87 = vld [vmem:[%s1 + $0xa8] sm:$0xff]
  %v88 = vld [vmem:[%s1 + $0xb0] sm:$0xff]
  %v89 = vld [vmem:[%s1 + $0xb8] sm:$0xff]
  %v90 = vld [vmem:[%s1 + $0xc0] sm:$0xff]
  %v91 = vld [vmem:[%s1 + $0xc8] sm:$0xff]
  %v92 = vld [vmem:[%s1 + $0xd0] sm:$0xff]
  %v93 = vld [vmem:[%s1 + $0xd8] sm:$0xff]
  %v94 = vld [vmem:[%s1 + $0xe0] sm:$0xff]
  %v95 = vld [vmem:[%s1 + $0xe8] sm:$0xff]
  %v96 = vld [vmem:[%s1 + $0xf0] sm:$0xff]
  %v97 = vld [vmem:[%s1 + $0xf8] sm:$0xff]
  %v98 = vld [vmem:[%s1 + $0x100] sm:$0xff]
  %v99 = vld [vmem:[%s1 + $0x108] sm:$0xff]
  %v100 = vld [vmem:[%s1 + $0x110] sm:$0xff]
  %v101 = vld [vmem:[%s1 + $0x118] sm:$0xff]
  %v102 = vld [vmem:[%s1 + $0x120] sm:$0xff]
  %v103 = vld [vmem:[%s1 + $0x128] sm:$0xff]
  %v104 = vld [vmem:[%s1 + $0x130] sm:$0xff]
  %v105 = vld [vmem:[%s1 + $0x138] sm:$0xff]
  %v106 = vld [vmem:[%s1 + $0x140] sm:$0xff]
  %v107 = vld [vmem:[%s1 + $0x148] sm:$0xff]
  %v108 = vld [vmem:[%s1 + $0x150] sm:$0xff]
  %v109 = vld [vmem:[%s1 + $0x158] sm:$0xff]
  %v110 = vld [vmem:[%s1 + $0x160] sm:$0xff]
  %v111 = vld [vmem:[%s1 + $0x168] sm:$0xff]
  %v112 = vld [vmem:[%s1 + $0x170] sm:$0xff]
  %v113 = vld [vmem:[%s1 + $0x178] sm:$0xff]
  %v114 = vld [vmem:[%s1 + $0x180] sm:$0xff]
  %v115 = vmax.f32 %v17, %v66
  %v116 = vmax.f32 %v18, %v67
  %v117 = vmax.f32 %v19, %v68
  %v118 = vmax.f32 %v20, %v69
  %v119 = vmax.f32 %v21, %v70
  %v120 = vmax.f32 %v22, %v71
  %v121 = vmax.f32 %v23, %v72
  %v122 = vmax.f32 %v24, %v73
  %v123 = vmax.f32 %v25, %v74
  %v124 = vmax.f32 %v26, %v75
  %v125 = vmax.f32 %v27, %v76
  %v126 = vmax.f32 %v28, %v77
  %v127 = vmax.f32 %v29, %v78
  %v128 = vmax.f32 %v30, %v79
  %v129 = vmax.f32 %v31, %v80
  %v130 = vmax.f32 %v32, %v81
  %v131 = vmax.f32 %v33, %v82
  %v132 = vmax.f32 %v34, %v83
  %v133 = vmax.f32 %v35, %v84
  %v134 = vmax.f32 %v36, %v85
  %v135 = vmax.f32 %v37, %v86
  %v136 = vmax.f32 %v38, %v87
  %v137 = vmax.f32 %v39, %v88
  %v138 = vmax.f32 %v40, %v89
  %v139 = vmax.f32 %v41, %v90
  %v140 = vmax.f32 %v42, %v91
  %v141 = vmax.f32 %v43, %v92
  %v142 = vmax.f32 %v44, %v93
  %v143 = vmax.f32 %v45, %v94
  %v144 = vmax.f32 %v46, %v95
  %v145 = vmax.f32 %v47, %v96
  %v146 = vmax.f32 %v48, %v97
  %v147 = vmax.f32 %v49, %v98
  %v148 = vmax.f32 %v50, %v99
  %v149 = vmax.f32 %v51, %v100
  %v150 = vmax.f32 %v52, %v101
  %v151 = vmax.f32 %v53, %v102
  %v152 = vmax.f32 %v54, %v103
  %v153 = vmax.f32 %v55, %v104
  %v154 = vmax.f32 %v56, %v105
  %v155 = vmax.f32 %v57, %v106
  %v156 = vmax.f32 %v58, %v107
  %v157 = vmax.f32 %v59, %v108
  %v158 = vmax.f32 %v60, %v109
  %v159 = vmax.f32 %v61, %v110
  %v160 = vmax.f32 %v62, %v111
  %v161 = vmax.f32 %v63, %v112
  %v162 = vmax.f32 %v64, %v113
  %v163 = vmax.f32 %v65, %v114
  %v164 = vld [vmem:[%s2] sm:$0xff]
  %v165 = vld [vmem:[%s2 + $0x8] sm:$0xff]
  %v166 = vld [vmem:[%s2 + $0x10] sm:$0xff]
  %v167 = vld [vmem:[%s2 + $0x18] sm:$0xff]
  %v168 = vld [vmem:[%s2 + $0x20] sm:$0xff]
  %v169 = vld [vmem:[%s2 + $0x28] sm:$0xff]
  %v170 = vld [vmem:[%s2 + $0x30] sm:$0xff]
  %v171 = vld [vmem:[%s2 + $0x38] sm:$0xff]
  %v172 = vld [vmem:[%s2 + $0x40] sm:$0xff]
  %v173 = vld [vmem:[%s2 + $0x48] sm:$0xff]
  %v174 = vld [vmem:[%s2 + $0x50] sm:$0xff]
  %v175 = vld [vmem:[%s2 + $0x58] sm:$0xff]
  %v176 = vld [vmem:[%s2 + $0x60] sm:$0xff]
  %v177 = vld [vmem:[%s2 + $0x68] sm:$0xff]
  %v178 = vld [vmem:[%s2 + $0x70] sm:$0xff]
  %v179 = vld [vmem:[%s2 + $0x78] sm:$0xff]
  %v180 = vld [vmem:[%s2 + $0x80] sm:$0xff]
  %v181 = vld [vmem:[%s2 + $0x88] sm:$0xff]
  %v182 = vld [vmem:[%s2 + $0x90] sm:$0xff]
  %v183 = vld [vmem:[%s2 + $0x98] sm:$0xff]
  %v184 = vld [vmem:[%s2 + $0xa0] sm:$0xff]
  %v185 = vld [vmem:[%s2 + $0xa8] sm:$0xff]
  %v186 = vld [vmem:[%s2 + $0xb0] sm:$0xff]
  %v187 = vld [vmem:[%s2 + $0xb8] sm:$0xff]
  %v188 = vld [vmem:[%s2 + $0xc0] sm:$0xff]
  %v189 = vld [vmem:[%s2 + $0xc8] sm:$0xff]
  %v190 = vld [vmem:[%s2 + $0xd0] sm:$0xff]
  %v191 = vld [vmem:[%s2 + $0xd8] sm:$0xff]
  %v192 = vld [vmem:[%s2 + $0xe0] sm:$0xff]
  %v193 = vld [vmem:[%s2 + $0xe8] sm:$0xff]
  %v194 = vld [vmem:[%s2 + $0xf0] sm:$0xff]
  %v195 = vld [vmem:[%s2 + $0xf8] sm:$0xff]
  %v196 = vld [vmem:[%s2 + $0x100] sm:$0xff]
  %v197 = vld [vmem:[%s2 + $0x108] sm:$0xff]
  %v198 = vld [vmem:[%s2 + $0x110] sm:$0xff]
  %v199 = vld [vmem:[%s2 + $0x118] sm:$0xff]
  %v200 = vld [vmem:[%s2 + $0x120] sm:$0xff]
  %v201 = vld [vmem:[%s2 + $0x128] sm:$0xff]
  %v202 = vld [vmem:[%s2 + $0x130] sm:$0xff]
  %v203 = vld [vmem:[%s2 + $0x138] sm:$0xff]
  %v204 = vld [vmem:[%s2 + $0x140] sm:$0xff]
  %v205 = vld [vmem:[%s2 + $0x148] sm:$0xff]
  %v206 = vld [vmem:[%s2 + $0x150] sm:$0xff]
  %v207 = vld [vmem:[%s2 + $0x158] sm:$0xff]
  %v208 = vld [vmem:[%s2 + $0x160] sm:$0xff]
  %v209 = vld [vmem:[%s2 + $0x168] sm:$0xff]
  %v210 = vld [vmem:[%s2 + $0x170] sm:$0xff]
  %v211 = vld [vmem:[%s2 + $0x178] sm:$0xff]
  %v212 = vld [vmem:[%s2 + $0x180] sm:$0xff]
  %v213 = vld [vmem:[%s3] sm:$0xff]
  %v214 = vld [vmem:[%s3 + $0x8] sm:$0xff]
  %v215 = vld [vmem:[%s3 + $0x10] sm:$0xff]
  %v216 = vld [vmem:[%s3 + $0x18] sm:$0xff]
  %v217 = vld [vmem:[%s3 + $0x20] sm:$0xff]
  %v218 = vld [vmem:[%s3 + $0x28] sm:$0xff]
  %v219 = vld [vmem:[%s3 + $0x30] sm:$0xff]
  %v220 = vld [vmem:[%s3 + $0x38] sm:$0xff]
  %v221 = vld [vmem:[%s3 + $0x40] sm:$0xff]
  %v222 = vld [vmem:[%s3 + $0x48] sm:$0xff]
  %v223 = vld [vmem:[%s3 + $0x50] sm:$0xff]
  %v224 = vld [vmem:[%s3 + $0x58] sm:$0xff]
  %v225 = vld [vmem:[%s3 + $0x60] sm:$0xff]
  %v226 = vld [vmem:[%s3 + $0x68] sm:$0xff]
  %v227 = vld [vmem:[%s3 + $0x70] sm:$0xff]
  %v228 = vld [vmem:[%s3 + $0x78] sm:$0xff]
  %v229 = vld [vmem:[%s3 + $0x80] sm:$0xff]
  %v230 = vld [vmem:[%s3 + $0x88] sm:$0xff]
  %v231 = vld [vmem:[%s3 + $0x90] sm:$0xff]
  %v232 = vld [vmem:[%s3 + $0x98] sm:$0xff]
  %v233 = vld [vmem:[%s3 + $0xa0] sm:$0xff]
  %v234 = vld [vmem:[%s3 + $0xa8] sm:$0xff]
  %v235 = vld [vmem:[%s3 + $0xb0] sm:$0xff]
  %v236 = vld [vmem:[%s3 + $0xb8] sm:$0xff]
  %v237 = vld [vmem:[%s3 + $0xc0] sm:$0xff]
  %v238 = vld [vmem:[%s3 + $0xc8] sm:$0xff]
  %v239 = vld [vmem:[%s3 + $0xd0] sm:$0xff]
  %v240 = vld [vmem:[%s3 + $0xd8] sm:$0xff]
  %v241 = vld [vmem:[%s3 + $0xe0] sm:$0xff]
  %v242 = vld [vmem:[%s3 + $0xe8] sm:$0xff]
  %v243 = vld [vmem:[%s3 + $0xf0] sm:$0xff]
  %v244 = vld [vmem:[%s3 + $0xf8] sm:$0xff]
  %v245 = vld [vmem:[%s3 + $0x100] sm:$0xff]
  %v246 = vld [vmem:[%s3 + $0x108] sm:$0xff]
  %v247 = vld [vmem:[%s3 + $0x110] sm:$0xff]
  %v248 = vld [vmem:[%s3 + $0x118] sm:$0xff]
  %v249 = vld [vmem:[%s3 + $0x120] sm:$0xff]
  %v250 = vld [vmem:[%s3 + $0x128] sm:$0xff]
  %v251 = vld [vmem:[%s3 + $0x130] sm:$0xff]
  %v252 = vld [vmem:[%s3 + $0x138] sm:$0xff]
  %v253 = vld [vmem:[%s3 + $0x140] sm:$0xff]
  %v254 = vld [vmem:[%s3 + $0x148] sm:$0xff]
  %v255 = vld [vmem:[%s3 + $0x150] sm:$0xff]
  %v256 = vld [vmem:[%s3 + $0x158] sm:$0xff]
  %v257 = vld [vmem:[%s3 + $0x160] sm:$0xff]
  %v258 = vld [vmem:[%s3 + $0x168] sm:$0xff]
  %v259 = vld [vmem:[%s3 + $0x170] sm:$0xff]
  %v260 = vld [vmem:[%s3 + $0x178] sm:$0xff]
  %v261 = vld [vmem:[%s3 + $0x180] sm:$0xff]
  %v262 = vmax.f32 %v164, %v213
  %v263 = vmax.f32 %v165, %v214
  %v264 = vmax.f32 %v166, %v215
  %v265 = vmax.f32 %v167, %v216
  %v266 = vmax.f32 %v168, %v217
  %v267 = vmax.f32 %v169, %v218
  %v268 = vmax.f32 %v170, %v219
  %v269 = vmax.f32 %v171, %v220
  %v270 = vmax.f32 %v172, %v221
  %v271 = vmax.f32 %v173, %v222
  %v272 = vmax.f32 %v174, %v223
  %v273 = vmax.f32 %v175, %v224
  %v274 = vmax.f32 %v176, %v225
  %v275 = vmax.f32 %v177, %v226
  %v276 = vmax.f32 %v178, %v227
  %v277 = vmax.f32 %v179, %v228
  %v278 = vmax.f32 %v180, %v229
  %v279 = vmax.f32 %v181, %v230
  %v280 = vmax.f32 %v182, %v231
  %v281 = vmax.f32 %v183, %v232
  %v282 = vmax.f32 %v184, %v233
  %v283 = vmax.f32 %v185, %v234
  %v284 = vmax.f32 %v186, %v235
  %v285 = vmax.f32 %v187, %v236
  %v286 = vmax.f32 %v188, %v237
  %v287 = vmax.f32 %v189, %v238
  %v288 = vmax.f32 %v190, %v239
  %v289 = vmax.f32 %v191, %v240
  %v290 = vmax.f32 %v192, %v241
  %v291 = vmax.f32 %v193, %v242
  %v292 = vmax.f32 %v194, %v243
  %v293 = vmax.f32 %v195, %v244
  %v294 = vmax.f32 %v196, %v245
  %v295 = vmax.f32 %v197, %v246
  %v296 = vmax.f32 %v198, %v247
  %v297 = vmax.f32 %v199, %v248
  %v298 = vmax.f32 %v200, %v249
  %v299 = vmax.f32 %v201, %v250
  %v300 = vmax.f32 %v202, %v251
  %v301 = vmax.f32 %v203, %v252
  %v302 = vmax.f32 %v204, %v253
  %v303 = vmax.f32 %v205, %v254
  %v304 = vmax.f32 %v206, %v255
  %v305 = vmax.f32 %v207, %v256
  %v306 = vmax.f32 %v208, %v257
  %v307 = vmax.f32 %v209, %v258
  %v308 = vmax.f32 %v210, %v259
  %v309 = vmax.f32 %v211, %v260
  %v310 = vmax.f32 %v212, %v261
  %v311 = vmax.f32 %v115, %v262
  %v312 = vmax.f32 %v116, %v263
  %v313 = vmax.f32 %v117, %v264
  %v314 = vmax.f32 %v118, %v265
  %v315 = vmax.f32 %v119, %v266
  %v316 = vmax.f32 %v120, %v267
  %v317 = vmax.f32 %v121, %v268
  %v318 = vmax.f32 %v122, %v269
  %v319 = vmax.f32 %v123, %v270
  %v320 = vmax.f32 %v124, %v271
  %v321 = vmax.f32 %v125, %v272
  %v322 = vmax.f32 %v126, %v273
  %v323 = vmax.f32 %v127, %v274
  %v324 = vmax.f32 %v128, %v275
  %v325 = vmax.f32 %v129, %v276
  %v326 = vmax.f32 %v130, %v277
  %v327 = vmax.f32 %v131, %v278
  %v328 = vmax.f32 %v132, %v279
  %v329 = vmax.f32 %v133, %v280
  %v330 = vmax.f32 %v134, %v281
  %v331 = vmax.f32 %v135, %v282
  %v332 = vmax.f32 %v136, %v283
  %v333 = vmax.f32 %v137, %v284
  %v334 = vmax.f32 %v138, %v285
  %v335 = vmax.f32 %v139, %v286
  %v336 = vmax.f32 %v140, %v287
  %v337 = vmax.f32 %v141, %v288
  %v338 = vmax.f32 %v142, %v289
  %v339 = vmax.f32 %v143, %v290
  %v340 = vmax.f32 %v144, %v291
  %v341 = vmax.f32 %v145, %v292
  %v342 = vmax.f32 %v146, %v293
  %v343 = vmax.f32 %v147, %v294
  %v344 = vmax.f32 %v148, %v295
  %v345 = vmax.f32 %v149, %v296
  %v346 = vmax.f32 %v150, %v297
  %v347 = vmax.f32 %v151, %v298
  %v348 = vmax.f32 %v152, %v299
  %v349 = vmax.f32 %v153, %v300
  %v350 = vmax.f32 %v154, %v301
  %v351 = vmax.f32 %v155, %v302
  %v352 = vmax.f32 %v156, %v303
  %v353 = vmax.f32 %v157, %v304
  %v354 = vmax.f32 %v158, %v305
  %v355 = vmax.f32 %v159, %v306
  %v356 = vmax.f32 %v160, %v307
  %v357 = vmax.f32 %v161, %v308
  %v358 = vmax.f32 %v162, %v309
  %v359 = vmax.f32 %v163, %v310
  %360 = vst [vmem:[%s4] sm:$0xff] %v311
  %361 = vst [vmem:[%s4 + $0x8] sm:$0xff] %v312
  %362 = vst [vmem:[%s4 + $0x10] sm:$0xff] %v313
  %363 = vst [vmem:[%s4 + $0x18] sm:$0xff] %v314
  %364 = vst [vmem:[%s4 + $0x20] sm:$0xff] %v315
  %365 = vst [vmem:[%s4 + $0x28] sm:$0xff] %v316
  %366 = vst [vmem:[%s4 + $0x30] sm:$0xff] %v317
  %367 = vst [vmem:[%s4 + $0x38] sm:$0xff] %v318
  %368 = vst [vmem:[%s4 + $0x40] sm:$0xff] %v319
  %369 = vst [vmem:[%s4 + $0x48] sm:$0xff] %v320
  %370 = vst [vmem:[%s4 + $0x50] sm:$0xff] %v321
  %371 = vst [vmem:[%s4 + $0x58] sm:$0xff] %v322
  %372 = vst [vmem:[%s4 + $0x60] sm:$0xff] %v323
  %373 = vst [vmem:[%s4 + $0x68] sm:$0xff] %v324
  %374 = vst [vmem:[%s4 + $0x70] sm:$0xff] %v325
  %375 = vst [vmem:[%s4 + $0x78] sm:$0xff] %v326
  %376 = vst [vmem:[%s4 + $0x80] sm:$0xff] %v327
  %377 = vst [vmem:[%s4 + $0x88] sm:$0xff] %v328
  %378 = vst [vmem:[%s4 + $0x90] sm:$0xff] %v329
  %379 = vst [vmem:[%s4 + $0x98] sm:$0xff] %v330
  %380 = vst [vmem:[%s4 + $0xa0] sm:$0xff] %v331
  %381 = vst [vmem:[%s4 + $0xa8] sm:$0xff] %v332
  %382 = vst [vmem:[%s4 + $0xb0] sm:$0xff] %v333
  %383 = vst [vmem:[%s4 + $0xb8] sm:$0xff] %v334
  %384 = vst [vmem:[%s4 + $0xc0] sm:$0xff] %v335
  %385 = vst [vmem:[%s4 + $0xc8] sm:$0xff] %v336
  %386 = vst [vmem:[%s4 + $0xd0] sm:$0xff] %v337
  %387 = vst [vmem:[%s4 + $0xd8] sm:$0xff] %v338
  %388 = vst [vmem:[%s4 + $0xe0] sm:$0xff] %v339
  %389 = vst [vmem:[%s4 + $0xe8] sm:$0xff] %v340
  %390 = vst [vmem:[%s4 + $0xf0] sm:$0xff] %v341
  %391 = vst [vmem:[%s4 + $0xf8] sm:$0xff] %v342
  %392 = vst [vmem:[%s4 + $0x100] sm:$0xff] %v343
  %393 = vst [vmem:[%s4 + $0x108] sm:$0xff] %v344
  %394 = vst [vmem:[%s4 + $0x110] sm:$0xff] %v345
  %395 = vst [vmem:[%s4 + $0x118] sm:$0xff] %v346
  %396 = vst [vmem:[%s4 + $0x120] sm:$0xff] %v347
  %397 = vst [vmem:[%s4 + $0x128] sm:$0xff] %v348
  %398 = vst [vmem:[%s4 + $0x130] sm:$0xff] %v349
  %399 = vst [vmem:[%s4 + $0x138] sm:$0xff] %v350
  %400 = vst [vmem:[%s4 + $0x140] sm:$0xff] %v351
  %401 = vst [vmem:[%s4 + $0x148] sm:$0xff] %v352
  %402 = vst [vmem:[%s4 + $0x150] sm:$0xff] %v353
  %403 = vst [vmem:[%s4 + $0x158] sm:$0xff] %v354
  %404 = vst [vmem:[%s4 + $0x160] sm:$0xff] %v355
  %405 = vst [vmem:[%s4 + $0x168] sm:$0xff] %v356
  %406 = vst [vmem:[%s4 + $0x170] sm:$0xff] %v357
  %407 = vst [vmem:[%s4 + $0x178] sm:$0xff] %v358
  %408 = vst [vmem:[%s4 + $0x180] sm:$0xff] %v359
  // Predicated region
  $region18: #{cnn_forward.8} parent=0 // pred_check
    _
  $region19: #{cnn_forward.8} parent=0 // pred_check_branch
    %410 = sbr.rel (0) target = $region21
  $region20: #{cnn_forward.8} parent=0 // pred_region
    _
  $region21: #{cnn_forward.8} parent=0 // pred_fallthru
    _
  // Predicated region
  $region22: #{cnn_forward.8} parent=0 // pred_check
    _
  $region23: #{cnn_forward.8} parent=0 // pred_check_branch
    %412 = sbr.rel (0) target = $region25
  $region24: #{cnn_forward.8} parent=0 // pred_region
    _
  $region25: #{cnn_forward.8} parent=0 // pred_fallthru
    _

// kernel: cnn_forward.7
$region0: #{cnn_forward.7}
  #allocation0 [shape = 'u32[]', space=smem, size = 0x4, offset = 0x4, fixed_abs, tag = 'smem constant byte address 0x4 - core index']
  #allocation1 [shape = 'u32[144,128]{1,0:T(1,128)}', space=vmem, size = 0x12000, scoped, tag = 'internal scratch']
  %s0 = inlined_call_operand.vmem [shape: f32[2048,128], index: 0, kind: input, shape index: {}]
  %s1 = inlined_call_operand.vmem [shape: f32[128,128], index: 1, kind: input, shape index: {}]
  %s2 = inlined_call_operand.vmem [shape: f32[1,128], index: 2, kind: input, shape index: {}]
  %s3 = inlined_call_operand.vmem [shape: f32[2048,128], index: 3, kind: output, shape index: {}]
  %s4 = sld [smem:[#allocation0]]
  $region45: #{cnn_forward.7} parent=0
    _
  %s6 = ssub.s32 1, %s4
  %s7 = scalar_select 0, %s6, %s4
  loop: start=0, step=1, limit=6
  $region2: #{cnn_forward.7} parent=0 // loop_pre_header
    _
  $region3: #{cnn_forward.7} parent=0 // loop_header
    %s9 = sphi 0, %s13
    %p10 = scmp.ge.s32.totalorder %s9, 6
    %s19 = sphi 0, %s21
    %s22 = sphi 0, %s19
    %s23 = sphi 0, %s22
    %s39 = sphi 0, %s23
    %s43 = sphi 0, %s43
    %s45 = sphi 0, %s43
    %s46 = sphi 0, %s45
    %s60 = sphi 0, %s46
    %s64 = sphi 0, %s64
    %s66 = sphi 0, %s64
    %s67 = sphi 0, %s66
    %s81 = sphi 0, %s67
    %s87 = sphi 0, %s89
    %s90 = sphi 0, %s87
    %s91 = sphi 0, %s90
    %s107 = sphi 0, %s91
  $region4: #{cnn_forward.7} parent=0 // loop_header_branch
    %12 = sbr.rel (%p10) target = $region8
  $region5: #{cnn_forward.7} parent=0 // loop_body
    %s14 = ssub.s32 %s9, 1
    %s15 = ssub.s32 %s9, 2
    %s16 = sadd.s32 %s9, 1
    %s17 = ssub.s32 %s9, %s16
    %p18 = scmp.eq.s32.totalorder %s17, 0
    %s20 = sadd.s32 %s19, 1
    %s21 = scalar_select %p18, %s19, %s20
    %p24 = pneg %p18
    %p25 = scmp.eq.s32.totalorder %s9, 3
    %p26 = por %p24, %p25
    %p27 = scmp.ne.s32.totalorder %s19, %s22
    %p28 = scmp.eq.s32.totalorder %s9, 0
    %p29 = por %p27, %p28
    %p30 = scmp.ne.s32.totalorder %s19, %s22
    %p31 = scmp.eq.s32.totalorder %s14, 3
    %p32 = por %p30, %p31
    %p33 = scmp.ne.s32.totalorder %s22, %s23
    %p34 = scmp.eq.s32.totalorder %s14, 0
    %p35 = por %p33, %p34
    %p36 = scmp.ne.s32.totalorder %s22, %s23
    %p37 = scmp.eq.s32.totalorder %s15, 3
    %p38 = por %p36, %p37
    %p40 = scmp.ne.s32.totalorder %s23, %s39
    %p41 = scmp.eq.s32.totalorder %s15, 0
    %p42 = por %p40, %p41
    %s44 = sadd.s32 %s43, 1
    %p47 = scmp.eq.s32.totalorder %s9, 3
    %p48 = scmp.ne.s32.totalorder %s43, %s45
    %p49 = scmp.eq.s32.totalorder %s9, 0
    %p50 = por %p48, %p49
    %p51 = scmp.ne.s32.totalorder %s43, %s45
    %p52 = scmp.eq.s32.totalorder %s14, 3
    %p53 = por %p51, %p52
    %p54 = scmp.ne.s32.totalorder %s45, %s46
    %p55 = scmp.eq.s32.totalorder %s14, 0
    %p56 = por %p54, %p55
    %p57 = scmp.ne.s32.totalorder %s45, %s46
    %p58 = scmp.eq.s32.totalorder %s15, 3
    %p59 = por %p57, %p58
    %p61 = scmp.ne.s32.totalorder %s46, %s60
    %p62 = scmp.eq.s32.totalorder %s15, 0
    %p63 = por %p61, %p62
    %s65 = sadd.s32 %s64, 1
    %p68 = scmp.eq.s32.totalorder %s9, 3
    %p69 = scmp.ne.s32.totalorder %s64, %s66
    %p70 = scmp.eq.s32.totalorder %s9, 0
    %p71 = por %p69, %p70
    %p72 = scmp.ne.s32.totalorder %s64, %s66
    %p73 = scmp.eq.s32.totalorder %s14, 3
    %p74 = por %p72, %p73
    %p75 = scmp.ne.s32.totalorder %s66, %s67
    %p76 = scmp.eq.s32.totalorder %s14, 0
    %p77 = por %p75, %p76
    %p78 = scmp.ne.s32.totalorder %s66, %s67
    %p79 = scmp.eq.s32.totalorder %s15, 3
    %p80 = por %p78, %p79
    %p82 = scmp.ne.s32.totalorder %s67, %s81
    %p83 = scmp.eq.s32.totalorder %s15, 0
    %p84 = por %p82, %p83
    %s85 = ssub.s32 %s9, %s16
    %p86 = scmp.eq.s32.totalorder %s85, 0
    %s88 = sadd.s32 %s87, 1
    %s89 = scalar_select %p86, %s87, %s88
    %p92 = pneg %p86
    %p93 = scmp.eq.s32.totalorder %s9, 3
    %p94 = por %p92, %p93
    %p95 = scmp.ne.s32.totalorder %s87, %s90
    %p96 = scmp.eq.s32.totalorder %s9, 0
    %p97 = por %p95, %p96
    %p98 = scmp.ne.s32.totalorder %s87, %s90
    %p99 = scmp.eq.s32.totalorder %s14, 3
    %p100 = por %p98, %p99
    %p101 = scmp.ne.s32.totalorder %s90, %s91
    %p102 = scmp.eq.s32.totalorder %s14, 0
    %p103 = por %p101, %p102
    %p104 = scmp.ne.s32.totalorder %s90, %s91
    %p105 = scmp.eq.s32.totalorder %s15, 3
    %p106 = por %p104, %p105
    %p108 = scmp.ne.s32.totalorder %s91, %s107
    %p109 = scmp.eq.s32.totalorder %s15, 0
    %p110 = por %p108, %p109
    %p111 = scmp.le.s32.totalorder 1, %s9
    %p112 = scmp.lt.s32.totalorder %s9, 5
    %p113 = pnand %p111, %p112
    %p114 = pneg %p113
    // Predicated region
    $region9: #{cnn_forward.7} parent=5 // pred_check
      _
    $region10: #{cnn_forward.7} parent=5 // pred_check_branch
      %116 = sbr.rel (%p113) target = $region12
    $region11: #{cnn_forward.7} parent=5 // pred_region
      %s117 = ssub.s32 %s9, 1
      // Predicated region
      $region13: #{cnn_forward.7} parent=11 // pred_check
        %p118 = pneg %p56
      $region14: #{cnn_forward.7} parent=11 // pred_check_branch
        %120 = sbr.rel (%p118) target = $region16
      $region15: #{cnn_forward.7} parent=11 // pred_region
        _
      $region16: #{cnn_forward.7} parent=11 // pred_fallthru
        _
      // Predicated region
      $region17: #{cnn_forward.7} parent=11 // pred_check
        %p121 = pneg %p77
      $region18: #{cnn_forward.7} parent=11 // pred_check_branch
        %123 = sbr.rel (%p121) target = $region20
      $region19: #{cnn_forward.7} parent=11 // pred_region
        _
      $region20: #{cnn_forward.7} parent=11 // pred_fallthru
        _
    $region12: #{cnn_forward.7} parent=5 // pred_fallthru
      _
    %p124 = scmp.lt.s32.totalorder %s9, 4
    // Predicated region
    $region21: #{cnn_forward.7} parent=5 // pred_check
      %p125 = pneg %p124
    $region22: #{cnn_forward.7} parent=5 // pred_check_branch
      %127 = sbr.rel (%p125) target = $region24
    $region23: #{cnn_forward.7} parent=5 // pred_region
      // Predicated region
      $region25: #{cnn_forward.7} parent=23 // pred_check
        %p128 = pneg %p29
      $region26: #{cnn_forward.7} parent=23 // pred_check_branch
        %130 = sbr.rel (%p128) target = $region28
      $region27: #{cnn_forward.7} parent=23 // pred_region
        %s131 = smul.u32 64, %s9
        %p132 = scmp.lt.s32.totalorder %s131, 255
        %s133 = scalar_select %p132, %s131, 255
        %s134 = smul.addr %s133, 8
        %s135 = scalar_lea.vmem %s0, %s134
        %s136 = smul.u32 64, %s9
      $region28: #{cnn_forward.7} parent=23 // pred_fallthru
        _
    $region24: #{cnn_forward.7} parent=5 // pred_fallthru
      _
    %p137 = scmp.le.s32.totalorder 1, %s9
    %p138 = scmp.lt.s32.totalorder %s9, 5
    %p139 = pnand %p137, %p138
    %p140 = pneg %p139
    // Predicated region
    $region29: #{cnn_forward.7} parent=5 // pred_check
      _
    $region30: #{cnn_forward.7} parent=5 // pred_check_branch
      %142 = sbr.rel (%p139) target = $region32
    $region31: #{cnn_forward.7} parent=5 // pred_region
      %s143 = ssub.s32 %s9, 1
      %s144 = smul.u32 64, %s14
      %p145 = scmp.lt.s32.totalorder %s144, 255
      %s146 = scalar_select %p145, %s144, 255
      %s147 = smul.addr %s146, 8
      %s148 = scalar_lea.vmem %s0, %s147
      %p149 = pneg %p35
      %p150 = pneg %p32
      %p151 = pneg %p56
      %p152 = pneg %p53
      %p153 = pneg %p77
      %p154 = pneg %p74
      %p155 = pneg %p103
      %p156 = pneg %p100
      %s157 = smul.u32 64, %s14
      %p158 = scmp.lt.s32.totalorder %s157, 255
      %s159 = scalar_select %p158, %s157, 255
      %s160 = smul.addr %s159, 8
      %s161 = scalar_lea.vmem %s3, %s160
      %s162 = smul.u32 64, %s14
      %p163 = scmp.lt.s32.totalorder %s162, 255
      %s164 = scalar_select %p163, %s162, 255
      %s165 = smul.addr %s164, 8
      %s166 = scalar_lea.vmem %s0, %s165
      %s167 = smul.u32 64, %s14
      %s168 = smul.u32 64, %s14
      %p169 = scmp.lt.s32.totalorder %s168, 255
      %s170 = scalar_select %p169, %s168, 255
      %s171 = smul.addr %s170, 8
      %s172 = scalar_lea.vmem %s3, %s171
      %s173 = smul.u32 64, %s14
      %v174 = vld [vmem:[%s166] sm:$0xff]
      %v175 = vld [vmem:[%s166 + $0x8] sm:$0xff]
      %v176 = vld [vmem:[%s166 + $0x10] sm:$0xff]
      %v177 = vld [vmem:[%s166 + $0x18] sm:$0xff]
      %v178 = vld [vmem:[%s166 + $0x20] sm:$0xff]
      %v179 = vld [vmem:[%s166 + $0x28] sm:$0xff]
      %v180 = vld [vmem:[%s166 + $0x30] sm:$0xff]
      %v181 = vld [vmem:[%s166 + $0x38] sm:$0xff]
      %v182 = vld [vmem:[%s166 + $0x40] sm:$0xff]
      %v183 = vld [vmem:[%s166 + $0x48] sm:$0xff]
      %v184 = vld [vmem:[%s166 + $0x50] sm:$0xff]
      %v185 = vld [vmem:[%s166 + $0x58] sm:$0xff]
      %v186 = vld [vmem:[%s166 + $0x60] sm:$0xff]
      %v187 = vld [vmem:[%s166 + $0x68] sm:$0xff]
      %v188 = vld [vmem:[%s166 + $0x70] sm:$0xff]
      %v189 = vld [vmem:[%s166 + $0x78] sm:$0xff]
      %v190 = vld [vmem:[%s166 + $0x80] sm:$0xff]
      %v191 = vld [vmem:[%s166 + $0x88] sm:$0xff]
      %v192 = vld [vmem:[%s166 + $0x90] sm:$0xff]
      %v193 = vld [vmem:[%s166 + $0x98] sm:$0xff]
      %v194 = vld [vmem:[%s166 + $0xa0] sm:$0xff]
      %v195 = vld [vmem:[%s166 + $0xa8] sm:$0xff]
      %v196 = vld [vmem:[%s166 + $0xb0] sm:$0xff]
      %v197 = vld [vmem:[%s166 + $0xb8] sm:$0xff]
      %v198 = vld [vmem:[%s166 + $0xc0] sm:$0xff]
      %v199 = vld [vmem:[%s166 + $0xc8] sm:$0xff]
      %v200 = vld [vmem:[%s166 + $0xd0] sm:$0xff]
      %v201 = vld [vmem:[%s166 + $0xd8] sm:$0xff]
      %v202 = vld [vmem:[%s166 + $0xe0] sm:$0xff]
      %v203 = vld [vmem:[%s166 + $0xe8] sm:$0xff]
      %v204 = vld [vmem:[%s166 + $0xf0] sm:$0xff]
      %v205 = vld [vmem:[%s166 + $0xf8] sm:$0xff]
      %v206 = vld [vmem:[%s166 + $0x100] sm:$0xff]
      %v207 = vld [vmem:[%s166 + $0x108] sm:$0xff]
      %v208 = vld [vmem:[%s166 + $0x110] sm:$0xff]
      %v209 = vld [vmem:[%s166 + $0x118] sm:$0xff]
      %v210 = vld [vmem:[%s166 + $0x120] sm:$0xff]
      %v211 = vld [vmem:[%s166 + $0x128] sm:$0xff]
      %v212 = vld [vmem:[%s166 + $0x130] sm:$0xff]
      %v213 = vld [vmem:[%s166 + $0x138] sm:$0xff]
      %v214 = vld [vmem:[%s166 + $0x140] sm:$0xff]
      %v215 = vld [vmem:[%s166 + $0x148] sm:$0xff]
      %v216 = vld [vmem:[%s166 + $0x150] sm:$0xff]
      %v217 = vld [vmem:[%s166 + $0x158] sm:$0xff]
      %v218 = vld [vmem:[%s166 + $0x160] sm:$0xff]
      %v219 = vld [vmem:[%s166 + $0x168] sm:$0xff]
      %v220 = vld [vmem:[%s166 + $0x170] sm:$0xff]
      %v221 = vld [vmem:[%s166 + $0x178] sm:$0xff]
      %v222 = vld [vmem:[%s166 + $0x180] sm:$0xff]
      %v223 = vld [vmem:[%s166 + $0x188] sm:$0xff]
      %v224 = vld [vmem:[%s166 + $0x190] sm:$0xff]
      %v225 = vld [vmem:[%s166 + $0x198] sm:$0xff]
      %v226 = vld [vmem:[%s166 + $0x1a0] sm:$0xff]
      %v227 = vld [vmem:[%s166 + $0x1a8] sm:$0xff]
      %v228 = vld [vmem:[%s166 + $0x1b0] sm:$0xff]
      %v229 = vld [vmem:[%s166 + $0x1b8] sm:$0xff]
      %v230 = vld [vmem:[%s166 + $0x1c0] sm:$0xff]
      %v231 = vld [vmem:[%s166 + $0x1c8] sm:$0xff]
      %v232 = vld [vmem:[%s166 + $0x1d0] sm:$0xff]
      %v233 = vld [vmem:[%s166 + $0x1d8] sm:$0xff]
      %v234 = vld [vmem:[%s166 + $0x1e0] sm:$0xff]
      %v235 = vld [vmem:[%s166 + $0x1e8] sm:$0xff]
      %v236 = vld [vmem:[%s166 + $0x1f0] sm:$0xff]
      %v237 = vld [vmem:[%s166 + $0x1f8] sm:$0xff]
      %v238 = vld [vmem:[%s1] sm:$0xff]
      %v239 = vld [vmem:[%s1 + $0x8] sm:$0xff]
      %v240 = vld [vmem:[%s1 + $0x10] sm:$0xff]
      %v241 = vld [vmem:[%s1 + $0x18] sm:$0xff]
      %v242 = vld [vmem:[%s1 + $0x20] sm:$0xff]
      %v243 = vld [vmem:[%s1 + $0x28] sm:$0xff]
      %v244 = vld [vmem:[%s1 + $0x30] sm:$0xff]
      %v245 = vld [vmem:[%s1 + $0x38] sm:$0xff]
      %v246 = vld [vmem:[%s1 + $0x40] sm:$0xff]
      %v247 = vld [vmem:[%s1 + $0x48] sm:$0xff]
      %v248 = vld [vmem:[%s1 + $0x50] sm:$0xff]
      %v249 = vld [vmem:[%s1 + $0x58] sm:$0xff]
      %v250 = vld [vmem:[%s1 + $0x60] sm:$0xff]
      %v251 = vld [vmem:[%s1 + $0x68] sm:$0xff]
      %v252 = vld [vmem:[%s1 + $0x70] sm:$0xff]
      %v253 = vld [vmem:[%s1 + $0x78] sm:$0xff]
      %v254 = vld [vmem:[%s2] sm:$0x1]
      %v256 = vlaneseq
      %v257 = vshrl.u32 %v256, 7
      %v258 = vsub.s32 0, %v257
      %v259 = vrot.slane %v254, %v258
      %261 = vmatprep.subr.mxu0 0.0
      %262 = vmatpush1.msra.mxu0 %v238
      %263 = vmatprep.subr.mxu0 0.0
      %264 = vmatpush1.msra.mxu0 %v239
      %265 = vmatprep.subr.mxu0 0.0
      %266 = vmatpush1.msra.mxu0 %v240
      %267 = vmatprep.subr.mxu0 0.0
      %268 = vmatpush1.msra.mxu0 %v241
      %269 = vmatprep.subr.mxu0 0.0
      %270 = vmatpush1.msra.mxu0 %v242
      %271 = vmatprep.subr.mxu0 0.0
      %272 = vmatpush1.msra.mxu0 %v243
      %273 = vmatprep.subr.mxu0 0.0
      %274 = vmatpush1.msra.mxu0 %v244
      %275 = vmatprep.subr.mxu0 0.0
      %276 = vmatpush1.msra.mxu0 %v245
      %277 = vmatprep.subr.mxu0 0.0
      %278 = vmatpush1.msra.mxu0 %v246
      %279 = vmatprep.subr.mxu0 0.0
      %280 = vmatpush1.msra.mxu0 %v247
      %281 = vmatprep.subr.mxu0 0.0
      %282 = vmatpush1.msra.mxu0 %v248
      %283 = vmatprep.subr.mxu0 0.0
      %284 = vmatpush1.msra.mxu0 %v249
      %285 = vmatprep.subr.mxu0 0.0
      %286 = vmatpush1.msra.mxu0 %v250
      %287 = vmatprep.subr.mxu0 0.0
      %288 = vmatpush1.msra.mxu0 %v251
      %289 = vmatprep.subr.mxu0 0.0
      %290 = vmatpush1.msra.mxu0 %v252
      %291 = vmatprep.subr.mxu0 0.0
      %292 = vmatpush1.msra.mxu0 %v253
      %293 = vmatprep.subr.mxu0 0.0
      %294 = vmatpush1.msra.mxu0 0.0
      %295 = vmatprep.subr.mxu0 0.0
      %296 = vmatpush1.msra.mxu0 0.0
      %297 = vmatprep.subr.mxu0 0.0
      %298 = vmatpush1.msra.mxu0 0.0
      %299 = vmatprep.subr.mxu0 0.0
      %300 = vmatpush1.msra.mxu0 0.0
      %301 = vmatprep.subr.mxu0 0.0
      %302 = vmatpush1.msra.mxu0 0.0
      %303 = vmatprep.subr.mxu0 0.0
      %304 = vmatpush1.msra.mxu0 0.0
      %305 = vmatprep.subr.mxu0 0.0
      %306 = vmatpush1.msra.mxu0 0.0
      %307 = vmatprep.subr.mxu0 0.0
      %308 = vmatpush1.msra.mxu0 0.0
      %309 = vmatprep.subr.mxu0 0.0
      %310 = vmatpush1.msra.mxu0 0.0
      %311 = vmatprep.subr.mxu0 0.0
      %312 = vmatpush1.msra.mxu0 0.0
      %313 = vmatprep.subr.mxu0 0.0
      %314 = vmatpush1.msra.mxu0 0.0
      %315 = vmatprep.subr.mxu0 0.0
      %316 = vmatpush1.msra.mxu0 0.0
      %317 = vmatprep.subr.mxu0 0.0
      %318 = vmatpush1.msra.mxu0 0.0
      %319 = vmatprep.subr.mxu0 0.0
      %320 = vmatpush1.msra.mxu0 0.0
      %321 = vmatprep.subr.mxu0 0.0
      %322 = vmatpush1.msra.mxu0 0.0
      %323 = vmatprep.subr.mxu0 0.0
      %324 = vmatpush1.msra.mxu0 0.0
      %325 = vmatprep.mubr.f32.mxu0 0.0
      %326 = vmatmul.mubr.f32.gmra.mrb[0].mxu0 %v174
      %v327 = vpop.f32.mrb[0].mxu0
      %v328 = vadd.f32 %v259, %v327
      %v329 = vpop.f32.mrb[0].mxu0
      %330 = vmatprep.mubr.f32.mxu0 0.0
      %331 = vmatmul.mubr.f32.gmra.mrb[0].mxu0 %v175
      %v332 = vpop.f32.mrb[0].mxu0
      %v333 = vadd.f32 %v259, %v332
      %v334 = vpop.f32.mrb[0].mxu0
      %335 = vmatprep.mubr.f32.mxu0 0.0
      %336 = vmatmul.mubr.f32.gmra.mrb[0].mxu0 %v176
      %v337 = vpop.f32.mrb[0].mxu0
      %v338 = vadd.f32 %v259, %v337
      %v339 = vpop.f32.mrb[0].mxu0
      %340 = vmatprep.mubr.f32.mxu0 0.0
      %341 = vmatmul.mubr.f32.gmra.mrb[0].mxu0 %v177
      %v342 = vpop.f32.mrb[0].mxu0
      %v343 = vadd.f32 %v259, %v342
      %v344 = vpop.f32.mrb[0].mxu0
      %345 = vmatprep.mubr.f32.mxu0 0.0
      %346 = vmatmul.mubr.f32.gmra.mrb[0].mxu0 %v178
      %v347 = vpop.f32.mrb[0].mxu0
      %v348 = vadd.f32 %v259, %v347
      %v349 = vpop.f32.mrb[0].mxu0
      %350 = vmatprep.mubr.f32.mxu0 0.0
      %351 = vmatmul.mubr.f32.gmra.mrb[0].mxu0 %v179
      %v352 = vpop.f32.mrb[0].mxu0
      %v353 = vadd.f32 %v259, %v352
      %v354 = vpop.f32.mrb[0].mxu0
      %355 = vmatprep.mubr.f32.mxu0 0.0
      %356 = vmatmul.mubr.f32.gmra.mrb[0].mxu0 %v180
      %v357 = vpop.f32.mrb[0].mxu0
      %v358 = vadd.f32 %v259, %v357
      %v359 = vpop.f32.mrb[0].mxu0
      %360 = vmatprep.mubr.f32.mxu0 0.0
      %361 = vmatmul.mubr.f32.gmra.mrb[0].mxu0 %v181
      %v362 = vpop.f32.mrb[0].mxu0
      %v363 = vadd.f32 %v259, %v362
      %v364 = vpop.f32.mrb[0].mxu0
      %365 = vmatprep.mubr.f32.mxu0 0.0
      %366 = vmatmul.mubr.f32.gmra.mrb[0].mxu0 %v182
      %v367 = vpop.f32.mrb[0].mxu0
      %v368 = vadd.f32 %v259, %v367
      %v369 = vpop.f32.mrb[0].mxu0
      %370 = vmatprep.mubr.f32.mxu0 0.0
      %371 = vmatmul.mubr.f32.gmra.mrb[0].mxu0 %v183
      %v372 = vpop.f32.mrb[0].mxu0
      %v373 = vadd.f32 %v259, %v372
      %v374 = vpop.f32.mrb[0].mxu0
      %375 = vmatprep.mubr.f32.mxu0 0.0
      %376 = vmatmul.mubr.f32.gmra.mrb[0].mxu0 %v184
      %v377 = vpop.f32.mrb[0].mxu0
      %v378 = vadd.f32 %v259, %v377
      %v379 = vpop.f32.mrb[0].mxu0
      %380 = vmatprep.mubr.f32.mxu0 0.0
      %381 = vmatmul.mubr.f32.gmra.mrb[0].mxu0 %v185
      %v382 = vpop.f32.mrb[0].mxu0
      %v383 = vadd.f32 %v259, %v382
      %v384 = vpop.f32.mrb[0].mxu0
      %385 = vmatprep.mubr.f32.mxu0 0.0
      %386 = vmatmul.mubr.f32.gmra.mrb[0].mxu0 %v186
      %v387 = vpop.f32.mrb[0].mxu0
      %v388 = vadd.f32 %v259, %v387
      %v389 = vpop.f32.mrb[0].mxu0
      %390 = vmatprep.mubr.f32.mxu0 0.0
      %391 = vmatmul.mubr.f32.gmra.mrb[0].mxu0 %v187
      %v392 = vpop.f32.mrb[0].mxu0
      %v393 = vadd.f32 %v259, %v392
      %v394 = vpop.f32.mrb[0].mxu0
      %395 = vmatprep.mubr.f32.mxu0 0.0
      %396 = vmatmul.mubr.f32.gmra.mrb[0].mxu0 %v188
      %v397 = vpop.f32.mrb[0].mxu0
      %v398 = vadd.f32 %v259, %v397
      %v399 = vpop.f32.mrb[0].mxu0
      %400 = vmatprep.mubr.f32.mxu0 0.0
      %401 = vmatmul.mubr.f32.gmra.mrb[0].mxu0 %v189
      %v402 = vpop.f32.mrb[0].mxu0
      %v403 = vadd.f32 %v259, %v402
      %v404 = vpop.f32.mrb[0].mxu0
      %405 = vmatprep.mubr.f32.mxu0 0.0
      %406 = vmatmul.mubr.f32.gmra.mrb[0].mxu0 %v190
      %v407 = vpop.f32.mrb[0].mxu0
      %v408 = vadd.f32 %v259, %v407
      %v409 = vpop.f32.mrb[0].mxu0
      %410 = vmatprep.mubr.f32.mxu0 0.0
      %411 = vmatmul.mubr.f32.gmra.mrb[0].mxu0 %v191
      %v412 = vpop.f32.mrb[0].mxu0
      %v413 = vadd.f32 %v259, %v412
      %v414 = vpop.f32.mrb[0].mxu0
      %415 = vmatprep.mubr.f32.mxu0 0.0
      %416 = vmatmul.mubr.f32.gmra.mrb[0].mxu0 %v192
      %v417 = vpop.f32.mrb[0].mxu0
      %v418 = vadd.f32 %v259, %v417
      %v419 = vpop.f32.mrb[0].mxu0
      %420 = vmatprep.mubr.f32.mxu0 0.0
      %421 = vmatmul.mubr.f32.gmra.mrb[0].mxu0 %v193
      %v422 = vpop.f32.mrb[0].mxu0
      %v423 = vadd.f32 %v259, %v422
      %v424 = vpop.f32.mrb[0].mxu0
      %425 = vmatprep.mubr.f32.mxu0 0.0
      %426 = vmatmul.mubr.f32.gmra.mrb[0].mxu0 %v194
      %v427 = vpop.f32.mrb[0].mxu0
      %v428 = vadd.f32 %v259, %v427
      %v429 = vpop.f32.mrb[0].mxu0
      %430 = vmatprep.mubr.f32.mxu0 0.0
      %431 = vmatmul.mubr.f32.gmra.mrb[0].mxu0 %v195
      %v432 = vpop.f32.mrb[0].mxu0
      %v433 = vadd.f32 %v259, %v432
      %v434 = vpop.f32.mrb[0].mxu0
      %435 = vmatprep.mubr.f32.mxu0 0.0
      %436 = vmatmul.mubr.f32.gmra.mrb[0].mxu0 %v196
      %v437 = vpop.f32.mrb[0].mxu0
      %v438 = vadd.f32 %v259, %v437
      %v439 = vpop.f32.mrb[0].mxu0
      %440 = vmatprep.mubr.f32.mxu0 0.0
      %441 = vmatmul.mubr.f32.gmra.mrb[0].mxu0 %v197
      %v442 = vpop.f32.mrb[0].mxu0
      %v443 = vadd.f32 %v259, %v442
      %v444 = vpop.f32.mrb[0].mxu0
      %445 = vmatprep.mubr.f32.mxu0 0.0
      %446 = vmatmul.mubr.f32.gmra.mrb[0].mxu0 %v198
      %v447 = vpop.f32.mrb[0].mxu0
      %v448 = vadd.f32 %v259, %v447
      %v449 = vpop.f32.mrb[0].mxu0
      %450 = vmatprep.mubr.f32.mxu0 0.0
      %451 = vmatmul.mubr.f32.gmra.mrb[0].mxu0 %v199
      %v452 = vpop.f32.mrb[0].mxu0
      %v453 = vadd.f32 %v259, %v452
      %v454 = vpop.f32.mrb[0].mxu0
      %455 = vmatprep.mubr.f32.mxu0 0.0
      %456 = vmatmul.mubr.f32.gmra.mrb[0].mxu0 %v200
      %v457 = vpop.f32.mrb[0].mxu0
      %v458 = vadd.f32 %v259, %v457
      %v459 = vpop.f32.mrb[0].mxu0
      %460 = vmatprep.mubr.f32.mxu0 0.0
      %461 = vmatmul.mubr.f32.gmra.mrb[0].mxu0 %v201
      %v462 = vpop.f32.mrb[0].mxu0
      %v463 = vadd.f32 %v259, %v462
      %v464 = vpop.f32.mrb[0].mxu0
      %465 = vmatprep.mubr.f32.mxu0 0.0
      %466 = vmatmul.mubr.f32.gmra.mrb[0].mxu0 %v202
      %v467 = vpop.f32.mrb[0].mxu0
      %v468 = vadd.f32 %v259, %v467
      %v469 = vpop.f32.mrb[0].mxu0
      %470 = vmatprep.mubr.f32.mxu0 0.0
      %471 = vmatmul.mubr.f32.gmra.mrb[0].mxu0 %v203
      %v472 = vpop.f32.mrb[0].mxu0
      %v473 = vadd.f32 %v259, %v472
      %v474 = vpop.f32.mrb[0].mxu0
      %475 = vmatprep.mubr.f32.mxu0 0.0
      %476 = vmatmul.mubr.f32.gmra.mrb[0].mxu0 %v204
      %v477 = vpop.f32.mrb[0].mxu0
      %v478 = vadd.f32 %v259, %v477
      %v479 = vpop.f32.mrb[0].mxu0
      %480 = vmatprep.mubr.f32.mxu0 0.0
      %481 = vmatmul.mubr.f32.gmra.mrb[0].mxu0 %v205
      %v482 = vpop.f32.mrb[0].mxu0
      %v483 = vadd.f32 %v259, %v482
      %v484 = vpop.f32.mrb[0].mxu0
      %485 = vmatprep.mubr.f32.mxu0 0.0
      %486 = vmatmul.mubr.f32.gmra.mrb[0].mxu0 %v206
      %v487 = vpop.f32.mrb[0].mxu0
      %v488 = vadd.f32 %v259, %v487
      %v489 = vpop.f32.mrb[0].mxu0
      %490 = vmatprep.mubr.f32.mxu0 0.0
      %491 = vmatmul.mubr.f32.gmra.mrb[0].mxu0 %v207
      %v492 = vpop.f32.mrb[0].mxu0
      %v493 = vadd.f32 %v259, %v492
      %v494 = vpop.f32.mrb[0].mxu0
      %495 = vmatprep.mubr.f32.mxu0 0.0
      %496 = vmatmul.mubr.f32.gmra.mrb[0].mxu0 %v208
      %v497 = vpop.f32.mrb[0].mxu0
      %v498 = vadd.f32 %v259, %v497
      %v499 = vpop.f32.mrb[0].mxu0
      %500 = vmatprep.mubr.f32.mxu0 0.0
      %501 = vmatmul.mubr.f32.gmra.mrb[0].mxu0 %v209
      %v502 = vpop.f32.mrb[0].mxu0
      %v503 = vadd.f32 %v259, %v502
      %v504 = vpop.f32.mrb[0].mxu0
      %505 = vmatprep.mubr.f32.mxu0 0.0
      %506 = vmatmul.mubr.f32.gmra.mrb[0].mxu0 %v210
      %v507 = vpop.f32.mrb[0].mxu0
      %v508 = vadd.f32 %v259, %v507
      %v509 = vpop.f32.mrb[0].mxu0
      %510 = vmatprep.mubr.f32.mxu0 0.0
      %511 = vmatmul.mubr.f32.gmra.mrb[0].mxu0 %v211
      %v512 = vpop.f32.mrb[0].mxu0
      %v513 = vadd.f32 %v259, %v512
      %v514 = vpop.f32.mrb[0].mxu0
      %515 = vmatprep.mubr.f32.mxu0 0.0
      %516 = vmatmul.mubr.f32.gmra.mrb[0].mxu0 %v212
      %v517 = vpop.f32.mrb[0].mxu0
      %v518 = vadd.f32 %v259, %v517
      %v519 = vpop.f32.mrb[0].mxu0
      %520 = vmatprep.mubr.f32.mxu0 0.0
      %521 = vmatmul.mubr.f32.gmra.mrb[0].mxu0 %v213
      %v522 = vpop.f32.mrb[0].mxu0
      %v523 = vadd.f32 %v259, %v522
      %v524 = vpop.f32.mrb[0].mxu0
      %525 = vmatprep.mubr.f32.mxu0 0.0
      %526 = vmatmul.mubr.f32.gmra.mrb[0].mxu0 %v214
      %v527 = vpop.f32.mrb[0].mxu0
      %v528 = vadd.f32 %v259, %v527
      %v529 = vpop.f32.mrb[0].mxu0
      %530 = vmatprep.mubr.f32.mxu0 0.0
      %531 = vmatmul.mubr.f32.gmra.mrb[0].mxu0 %v215
      %v532 = vpop.f32.mrb[0].mxu0
      %v533 = vadd.f32 %v259, %v532
      %v534 = vpop.f32.mrb[0].mxu0
      %535 = vmatprep.mubr.f32.mxu0 0.0
      %536 = vmatmul.mubr.f32.gmra.mrb[0].mxu0 %v216
      %v537 = vpop.f32.mrb[0].mxu0
      %v538 = vadd.f32 %v259, %v537
      %v539 = vpop.f32.mrb[0].mxu0
      %540 = vmatprep.mubr.f32.mxu0 0.0
      %541 = vmatmul.mubr.f32.gmra.mrb[0].mxu0 %v217
      %v542 = vpop.f32.mrb[0].mxu0
      %v543 = vadd.f32 %v259, %v542
      %v544 = vpop.f32.mrb[0].mxu0
      %545 = vmatprep.mubr.f32.mxu0 0.0
      %546 = vmatmul.mubr.f32.gmra.mrb[0].mxu0 %v218
      %v547 = vpop.f32.mrb[0].mxu0
      %v548 = vadd.f32 %v259, %v547
      %v549 = vpop.f32.mrb[0].mxu0
      %550 = vmatprep.mubr.f32.mxu0 0.0
      %551 = vmatmul.mubr.f32.gmra.mrb[0].mxu0 %v219
      %v552 = vpop.f32.mrb[0].mxu0
      %v553 = vadd.f32 %v259, %v552
      %v554 = vpop.f32.mrb[0].mxu0
      %555 = vmatprep.mubr.f32.mxu0 0.0
      %556 = vmatmul.mubr.f32.gmra.mrb[0].mxu0 %v220
      %v557 = vpop.f32.mrb[0].mxu0
      %v558 = vadd.f32 %v259, %v557
      %v559 = vpop.f32.mrb[0].mxu0
      %560 = vmatprep.mubr.f32.mxu0 0.0
      %561 = vmatmul.mubr.f32.gmra.mrb[0].mxu0 %v221
      %v562 = vpop.f32.mrb[0].mxu0
      %v563 = vadd.f32 %v259, %v562
      %v564 = vpop.f32.mrb[0].mxu0
      %565 = vmatprep.mubr.f32.mxu0 0.0
      %566 = vmatmul.mubr.f32.gmra.mrb[0].mxu0 %v222
      %v567 = vpop.f32.mrb[0].mxu0
      %v568 = vadd.f32 %v259, %v567
      %v569 = vpop.f32.mrb[0].mxu0
      %570 = vmatprep.mubr.f32.mxu0 0.0
      %571 = vmatmul.mubr.f32.gmra.mrb[0].mxu0 %v223
      %v572 = vpop.f32.mrb[0].mxu0
      %v573 = vadd.f32 %v259, %v572
      %v574 = vpop.f32.mrb[0].mxu0
      %575 = vmatprep.mubr.f32.mxu0 0.0
      %576 = vmatmul.mubr.f32.gmra.mrb[0].mxu0 %v224
      %v577 = vpop.f32.mrb[0].mxu0
      %v578 = vadd.f32 %v259, %v577
      %v579 = vpop.f32.mrb[0].mxu0
      %580 = vmatprep.mubr.f32.mxu0 0.0
      %581 = vmatmul.mubr.f32.gmra.mrb[0].mxu0 %v225
      %v582 = vpop.f32.mrb[0].mxu0
      %v583 = vadd.f32 %v259, %v582
      %v584 = vpop.f32.mrb[0].mxu0
      %585 = vmatprep.mubr.f32.mxu0 0.0
      %586 = vmatmul.mubr.f32.gmra.mrb[0].mxu0 %v226
      %v587 = vpop.f32.mrb[0].mxu0
      %v588 = vadd.f32 %v259, %v587
      %v589 = vpop.f32.mrb[0].mxu0
      %590 = vmatprep.mubr.f32.mxu0 0.0
      %591 = vmatmul.mubr.f32.gmra.mrb[0].mxu0 %v227
      %v592 = vpop.f32.mrb[0].mxu0
      %v593 = vadd.f32 %v259, %v592
      %v594 = vpop.f32.mrb[0].mxu0
      %595 = vmatprep.mubr.f32.mxu0 0.0
      %596 = vmatmul.mubr.f32.gmra.mrb[0].mxu0 %v228
      %v597 = vpop.f32.mrb[0].mxu0
      %v598 = vadd.f32 %v259, %v597
      %v599 = vpop.f32.mrb[0].mxu0
      %600 = vmatprep.mubr.f32.mxu0 0.0
      %601 = vmatmul.mubr.f32.gmra.mrb[0].mxu0 %v229
      %v602 = vpop.f32.mrb[0].mxu0
      %v603 = vadd.f32 %v259, %v602
      %v604 = vpop.f32.mrb[0].mxu0
      %605 = vmatprep.mubr.f32.mxu0 0.0
      %606 = vmatmul.mubr.f32.gmra.mrb[0].mxu0 %v230
      %v607 = vpop.f32.mrb[0].mxu0
      %v608 = vadd.f32 %v259, %v607
      %v609 = vpop.f32.mrb[0].mxu0
      %610 = vmatprep.mubr.f32.mxu0 0.0
      %611 = vmatmul.mubr.f32.gmra.mrb[0].mxu0 %v231
      %v612 = vpop.f32.mrb[0].mxu0
      %v613 = vadd.f32 %v259, %v612
      %v614 = vpop.f32.mrb[0].mxu0
      %615 = vmatprep.mubr.f32.mxu0 0.0
      %616 = vmatmul.mubr.f32.gmra.mrb[0].mxu0 %v232
      %v617 = vpop.f32.mrb[0].mxu0
      %v618 = vadd.f32 %v259, %v617
      %v619 = vpop.f32.mrb[0].mxu0
      %620 = vmatprep.mubr.f32.mxu0 0.0
      %621 = vmatmul.mubr.f32.gmra.mrb[0].mxu0 %v233
      %v622 = vpop.f32.mrb[0].mxu0
      %v623 = vadd.f32 %v259, %v622
      %v624 = vpop.f32.mrb[0].mxu0
      %625 = vmatprep.mubr.f32.mxu0 0.0
      %626 = vmatmul.mubr.f32.gmra.mrb[0].mxu0 %v234
      %v627 = vpop.f32.mrb[0].mxu0
      %v628 = vadd.f32 %v259, %v627
      %v629 = vpop.f32.mrb[0].mxu0
      %630 = vmatprep.mubr.f32.mxu0 0.0
      %631 = vmatmul.mubr.f32.gmra.mrb[0].mxu0 %v235
      %v632 = vpop.f32.mrb[0].mxu0
      %v633 = vadd.f32 %v259, %v632
      %v634 = vpop.f32.mrb[0].mxu0
      %635 = vmatprep.mubr.f32.mxu0 0.0
      %636 = vmatmul.mubr.f32.gmra.mrb[0].mxu0 %v236
      %v637 = vpop.f32.mrb[0].mxu0
      %v638 = vadd.f32 %v259, %v637
      %v639 = vpop.f32.mrb[0].mxu0
      %640 = vmatprep.mubr.f32.mxu0 0.0
      %641 = vmatmul.mubr.f32.gmra.mrb[0].mxu0 %v237
      %v642 = vpop.f32.mrb[0].mxu0
      %v643 = vadd.f32 %v259, %v642
      %v644 = vpop.f32.mrb[0].mxu0
      %645 = vdwg.mxu0
      %v646 = vmax.f32 %v328, 0.0
      %v647 = vmax.f32 %v333, 0.0
      %v648 = vmax.f32 %v338, 0.0
      %v649 = vmax.f32 %v343, 0.0
      %v650 = vmax.f32 %v348, 0.0
      %v651 = vmax.f32 %v353, 0.0
      %v652 = vmax.f32 %v358, 0.0
      %v653 = vmax.f32 %v363, 0.0
      %v654 = vmax.f32 %v368, 0.0
      %v655 = vmax.f32 %v373, 0.0
      %v656 = vmax.f32 %v378, 0.0
      %v657 = vmax.f32 %v383, 0.0
      %v658 = vmax.f32 %v388, 0.0
      %v659 = vmax.f32 %v393, 0.0
      %v660 = vmax.f32 %v398, 0.0
      %v661 = vmax.f32 %v403, 0.0
      %v662 = vmax.f32 %v408, 0.0
      %v663 = vmax.f32 %v413, 0.0
      %v664 = vmax.f32 %v418, 0.0
      %v665 = vmax.f32 %v423, 0.0
      %v666 = vmax.f32 %v428, 0.0
      %v667 = vmax.f32 %v433, 0.0
      %v668 = vmax.f32 %v438, 0.0
      %v669 = vmax.f32 %v443, 0.0
      %v670 = vmax.f32 %v448, 0.0
      %v671 = vmax.f32 %v453, 0.0
      %v672 = vmax.f32 %v458, 0.0
      %v673 = vmax.f32 %v463, 0.0
      %v674 = vmax.f32 %v468, 0.0
      %v675 = vmax.f32 %v473, 0.0
      %v676 = vmax.f32 %v478, 0.0
      %v677 = vmax.f32 %v483, 0.0
      %v678 = vmax.f32 %v488, 0.0
      %v679 = vmax.f32 %v493, 0.0
      %v680 = vmax.f32 %v498, 0.0
      %v681 = vmax.f32 %v503, 0.0
      %v682 = vmax.f32 %v508, 0.0
      %v683 = vmax.f32 %v513, 0.0
      %v684 = vmax.f32 %v518, 0.0
      %v685 = vmax.f32 %v523, 0.0
      %v686 = vmax.f32 %v528, 0.0
      %v687 = vmax.f32 %v533, 0.0
      %v688 = vmax.f32 %v538, 0.0
      %v689 = vmax.f32 %v543, 0.0
      %v690 = vmax.f32 %v548, 0.0
      %v691 = vmax.f32 %v553, 0.0
      %v692 = vmax.f32 %v558, 0.0
      %v693 = vmax.f32 %v563, 0.0
      %v694 = vmax.f32 %v568, 0.0
      %v695 = vmax.f32 %v573, 0.0
      %v696 = vmax.f32 %v578, 0.0
      %v697 = vmax.f32 %v583, 0.0
      %v698 = vmax.f32 %v588, 0.0
      %v699 = vmax.f32 %v593, 0.0
      %v700 = vmax.f32 %v598, 0.0
      %v701 = vmax.f32 %v603, 0.0
      %v702 = vmax.f32 %v608, 0.0
      %v703 = vmax.f32 %v613, 0.0
      %v704 = vmax.f32 %v618, 0.0
      %v705 = vmax.f32 %v623, 0.0
      %v706 = vmax.f32 %v628, 0.0
      %v707 = vmax.f32 %v633, 0.0
      %v708 = vmax.f32 %v638, 0.0
      %v709 = vmax.f32 %v643, 0.0
      %710 = vst [vmem:[%s172] sm:$0xff] %v646
      %711 = vst [vmem:[%s172 + $0x8] sm:$0xff] %v647
      %712 = vst [vmem:[%s172 + $0x10] sm:$0xff] %v648
      %713 = vst [vmem:[%s172 + $0x18] sm:$0xff] %v649
      %714 = vst [vmem:[%s172 + $0x20] sm:$0xff] %v650
      %715 = vst [vmem:[%s172 + $0x28] sm:$0xff] %v651
      %716 = vst [vmem:[%s172 + $0x30] sm:$0xff] %v652
      %717 = vst [vmem:[%s172 + $0x38] sm:$0xff] %v653
      %718 = vst [vmem:[%s172 + $0x40] sm:$0xff] %v654
      %719 = vst [vmem:[%s172 + $0x48] sm:$0xff] %v655
      %720 = vst [vmem:[%s172 + $0x50] sm:$0xff] %v656
      %721 = vst [vmem:[%s172 + $0x58] sm:$0xff] %v657
      %722 = vst [vmem:[%s172 + $0x60] sm:$0xff] %v658
      %723 = vst [vmem:[%s172 + $0x68] sm:$0xff] %v659
      %724 = vst [vmem:[%s172 + $0x70] sm:$0xff] %v660
      %725 = vst [vmem:[%s172 + $0x78] sm:$0xff] %v661
      %726 = vst [vmem:[%s172 + $0x80] sm:$0xff] %v662
      %727 = vst [vmem:[%s172 + $0x88] sm:$0xff] %v663
      %728 = vst [vmem:[%s172 + $0x90] sm:$0xff] %v664
      %729 = vst [vmem:[%s172 + $0x98] sm:$0xff] %v665
      %730 = vst [vmem:[%s172 + $0xa0] sm:$0xff] %v666
      %731 = vst [vmem:[%s172 + $0xa8] sm:$0xff] %v667
      %732 = vst [vmem:[%s172 + $0xb0] sm:$0xff] %v668
      %733 = vst [vmem:[%s172 + $0xb8] sm:$0xff] %v669
      %734 = vst [vmem:[%s172 + $0xc0] sm:$0xff] %v670
      %735 = vst [vmem:[%s172 + $0xc8] sm:$0xff] %v671
      %736 = vst [vmem:[%s172 + $0xd0] sm:$0xff] %v672
      %737 = vst [vmem:[%s172 + $0xd8] sm:$0xff] %v673
      %738 = vst [vmem:[%s172 + $0xe0] sm:$0xff] %v674
      %739 = vst [vmem:[%s172 + $0xe8] sm:$0xff] %v675
      %740 = vst [vmem:[%s172 + $0xf0] sm:$0xff] %v676
      %741 = vst [vmem:[%s172 + $0xf8] sm:$0xff] %v677
      %742 = vst [vmem:[%s172 + $0x100] sm:$0xff] %v678
      %743 = vst [vmem:[%s172 + $0x108] sm:$0xff] %v679
      %744 = vst [vmem:[%s172 + $0x110] sm:$0xff] %v680
      %745 = vst [vmem:[%s172 + $0x118] sm:$0xff] %v681
      %746 = vst [vmem:[%s172 + $0x120] sm:$0xff] %v682
      %747 = vst [vmem:[%s172 + $0x128] sm:$0xff] %v683
      %748 = vst [vmem:[%s172 + $0x130] sm:$0xff] %v684
      %749 = vst [vmem:[%s172 + $0x138] sm:$0xff] %v685
      %750 = vst [vmem:[%s172 + $0x140] sm:$0xff] %v686
      %751 = vst [vmem:[%s172 + $0x148] sm:$0xff] %v687
      %752 = vst [vmem:[%s172 + $0x150] sm:$0xff] %v688
      %753 = vst [vmem:[%s172 + $0x158] sm:$0xff] %v689
      %754 = vst [vmem:[%s172 + $0x160] sm:$0xff] %v690
      %755 = vst [vmem:[%s172 + $0x168] sm:$0xff] %v691
      %756 = vst [vmem:[%s172 + $0x170] sm:$0xff] %v692
      %757 = vst [vmem:[%s172 + $0x178] sm:$0xff] %v693
      %758 = vst [vmem:[%s172 + $0x180] sm:$0xff] %v694
      %759 = vst [vmem:[%s172 + $0x188] sm:$0xff] %v695
      %760 = vst [vmem:[%s172 + $0x190] sm:$0xff] %v696
      %761 = vst [vmem:[%s172 + $0x198] sm:$0xff] %v697
      %762 = vst [vmem:[%s172 + $0x1a0] sm:$0xff] %v698
      %763 = vst [vmem:[%s172 + $0x1a8] sm:$0xff] %v699
      %764 = vst [vmem:[%s172 + $0x1b0] sm:$0xff] %v700
      %765 = vst [vmem:[%s172 + $0x1b8] sm:$0xff] %v701
      %766 = vst [vmem:[%s172 + $0x1c0] sm:$0xff] %v702
      %767 = vst [vmem:[%s172 + $0x1c8] sm:$0xff] %v703
      %768 = vst [vmem:[%s172 + $0x1d0] sm:$0xff] %v704
      %769 = vst [vmem:[%s172 + $0x1d8] sm:$0xff] %v705
      %770 = vst [vmem:[%s172 + $0x1e0] sm:$0xff] %v706
      %771 = vst [vmem:[%s172 + $0x1e8] sm:$0xff] %v707
      %772 = vst [vmem:[%s172 + $0x1f0] sm:$0xff] %v708
      %773 = vst [vmem:[%s172 + $0x1f8] sm:$0xff] %v709
      %s774 = smul.u32 64, %s14
      %p775 = scmp.lt.s32.totalorder %s774, 255
      %s776 = scalar_select %p775, %s774, 255
      %s777 = smul.addr %s776, 8
      %s778 = scalar_lea.vmem %s3, %s777
      // Predicated region
      $region33: #{cnn_forward.7} parent=31 // pred_check
        %p779 = pneg %p100
      $region34: #{cnn_forward.7} parent=31 // pred_check_branch
        %781 = sbr.rel (%p779) target = $region36
      $region35: #{cnn_forward.7} parent=31 // pred_region
        %s782 = smul.u32 64, %s14
      $region36: #{cnn_forward.7} parent=31 // pred_fallthru
        _
    $region32: #{cnn_forward.7} parent=5 // pred_fallthru
      _
    %p783 = scmp.le.s32.totalorder 2, %s9
    // Predicated region
    $region37: #{cnn_forward.7} parent=5 // pred_check
      %p784 = pneg %p783
    $region38: #{cnn_forward.7} parent=5 // pred_check_branch
      %786 = sbr.rel (%p784) target = $region40
    $region39: #{cnn_forward.7} parent=5 // pred_region
      %s787 = ssub.s32 %s9, 2
      // Predicated region
      $region41: #{cnn_forward.7} parent=39 // pred_check
        %p788 = pneg %p106
      $region42: #{cnn_forward.7} parent=39 // pred_check_branch
        %790 = sbr.rel (%p788) target = $region44
      $region43: #{cnn_forward.7} parent=39 // pred_region
        %s791 = smul.u32 64, %s15
        %p792 = scmp.lt.s32.totalorder %s791, 255
        %s793 = scalar_select %p792, %s791, 255
        %s794 = smul.addr %s793, 8
        %s795 = scalar_lea.vmem %s3, %s794
      $region44: #{cnn_forward.7} parent=39 // pred_fallthru
        _
    $region40: #{cnn_forward.7} parent=5 // pred_fallthru
      _
  $region6: #{cnn_forward.7} parent=0 // loop_footer
    %s13 = sadd.s32 1, %s9
  $region7: #{cnn_forward.7} parent=0 // loop_footer_branch
    %8 = sbr.rel target = $region3
  $region8: #{cnn_forward.7} parent=0 // loop_exit
    _

// kernel: cnn_forward.9
$region0: #{cnn_forward.9}
  #allocation0 [shape = 'u32[]', space=smem, size = 0x4, offset = 0x4, fixed_abs, tag = 'smem constant byte address 0x4 - core index']
  #allocation1 [shape = 'u32[144,128]{1,0:T(1,128)}', space=vmem, size = 0x12000, scoped, tag = 'internal scratch']
  %s0 = inlined_call_operand.vmem [shape: f32[200,256], index: 0, kind: input, shape index: {}]
  %s1 = inlined_call_operand.vmem [shape: f32[256,128], index: 1, kind: input, shape index: {}]
  %s2 = inlined_call_operand.vmem [shape: f32[1,128], index: 2, kind: input, shape index: {}]
  %s3 = inlined_call_operand.vmem [shape: f32[200,128], index: 3, kind: output, shape index: {}]
  %s4 = sld [smem:[#allocation0]]
  $region22: #{cnn_forward.9} parent=0
    _
  %s6 = ssub.s32 1, %s4
  %s7 = scalar_select 0, %s6, %s4
  // Predicated region
  $region2: #{cnn_forward.9} parent=0 // pred_check
    _
  $region3: #{cnn_forward.9} parent=0 // pred_check_branch
    %9 = sbr.rel (0) target = $region5
  $region4: #{cnn_forward.9} parent=0 // pred_region
    _
  $region5: #{cnn_forward.9} parent=0 // pred_fallthru
    _
  // Predicated region
  $region6: #{cnn_forward.9} parent=0 // pred_check
    _
  $region7: #{cnn_forward.9} parent=0 // pred_check_branch
    %11 = sbr.rel (0) target = $region9
  $region8: #{cnn_forward.9} parent=0 // pred_region
    _
  $region9: #{cnn_forward.9} parent=0 // pred_fallthru
    _
  // Predicated region
  $region10: #{cnn_forward.9} parent=0 // pred_check
    _
  $region11: #{cnn_forward.9} parent=0 // pred_check_branch
    %13 = sbr.rel (0) target = $region13
  $region12: #{cnn_forward.9} parent=0 // pred_region
    _
  $region13: #{cnn_forward.9} parent=0 // pred_fallthru
    _
  %v14 = vld [vmem:[%s0] sm:$0xff]
  %v15 = vld [vmem:[%s0 + $0x8] sm:$0xff]
  %v16 = vld [vmem:[%s0 + $0x10] sm:$0xff]
  %v17 = vld [vmem:[%s0 + $0x18] sm:$0xff]
  %v18 = vld [vmem:[%s0 + $0x20] sm:$0xff]
  %v19 = vld [vmem:[%s0 + $0x28] sm:$0xff]
  %v20 = vld [vmem:[%s0 + $0x30] sm:$0xff]
  %v21 = vld [vmem:[%s0 + $0x38] sm:$0xff]
  %v22 = vld [vmem:[%s0 + $0x40] sm:$0xff]
  %v23 = vld [vmem:[%s0 + $0x48] sm:$0xff]
  %v24 = vld [vmem:[%s0 + $0x50] sm:$0xff]
  %v25 = vld [vmem:[%s0 + $0x58] sm:$0xff]
  %v26 = vld [vmem:[%s0 + $0x60] sm:$0xff]
  %v27 = vld [vmem:[%s0 + $0x68] sm:$0xff]
  %v28 = vld [vmem:[%s0 + $0x70] sm:$0xff]
  %v29 = vld [vmem:[%s0 + $0x78] sm:$0xff]
  %v30 = vld [vmem:[%s0 + $0x80] sm:$0xff]
  %v31 = vld [vmem:[%s0 + $0x88] sm:$0xff]
  %v32 = vld [vmem:[%s0 + $0x90] sm:$0xff]
  %v33 = vld [vmem:[%s0 + $0x98] sm:$0xff]
  %v34 = vld [vmem:[%s0 + $0xa0] sm:$0xff]
  %v35 = vld [vmem:[%s0 + $0xa8] sm:$0xff]
  %v36 = vld [vmem:[%s0 + $0xb0] sm:$0xff]
  %v37 = vld [vmem:[%s0 + $0xb8] sm:$0xff]
  %v38 = vld [vmem:[%s0 + $0xc0] sm:$0xff]
  %v39 = vld [vmem:[%s0 + $0xc8] sm:$0xff]
  %v40 = vld [vmem:[%s0 + $0xd0] sm:$0xff]
  %v41 = vld [vmem:[%s0 + $0xd8] sm:$0xff]
  %v42 = vld [vmem:[%s0 + $0xe0] sm:$0xff]
  %v43 = vld [vmem:[%s0 + $0xe8] sm:$0xff]
  %v44 = vld [vmem:[%s0 + $0xf0] sm:$0xff]
  %v45 = vld [vmem:[%s0 + $0xf8] sm:$0xff]
  %v46 = vld [vmem:[%s0 + $0x100] sm:$0xff]
  %v47 = vld [vmem:[%s0 + $0x108] sm:$0xff]
  %v48 = vld [vmem:[%s0 + $0x110] sm:$0xff]
  %v49 = vld [vmem:[%s0 + $0x118] sm:$0xff]
  %v50 = vld [vmem:[%s0 + $0x120] sm:$0xff]
  %v51 = vld [vmem:[%s0 + $0x128] sm:$0xff]
  %v52 = vld [vmem:[%s0 + $0x130] sm:$0xff]
  %v53 = vld [vmem:[%s0 + $0x138] sm:$0xff]
  %v54 = vld [vmem:[%s0 + $0x140] sm:$0xff]
  %v55 = vld [vmem:[%s0 + $0x148] sm:$0xff]
  %v56 = vld [vmem:[%s0 + $0x150] sm:$0xff]
  %v57 = vld [vmem:[%s0 + $0x158] sm:$0xff]
  %v58 = vld [vmem:[%s0 + $0x160] sm:$0xff]
  %v59 = vld [vmem:[%s0 + $0x168] sm:$0xff]
  %v60 = vld [vmem:[%s0 + $0x170] sm:$0xff]
  %v61 = vld [vmem:[%s0 + $0x178] sm:$0xff]
  %v62 = vld [vmem:[%s0 + $0x180] sm:$0xff]
  %v63 = vld [vmem:[%s0 + $0x188] sm:$0xff]
  %v64 = vld [vmem:[%s1] sm:$0xff]
  %v65 = vld [vmem:[%s1 + $0x8] sm:$0xff]
  %v66 = vld [vmem:[%s1 + $0x10] sm:$0xff]
  %v67 = vld [vmem:[%s1 + $0x18] sm:$0xff]
  %v68 = vld [vmem:[%s1 + $0x20] sm:$0xff]
  %v69 = vld [vmem:[%s1 + $0x28] sm:$0xff]
  %v70 = vld [vmem:[%s1 + $0x30] sm:$0xff]
  %v71 = vld [vmem:[%s1 + $0x38] sm:$0xff]
  %v72 = vld [vmem:[%s1 + $0x40] sm:$0xff]
  %v73 = vld [vmem:[%s1 + $0x48] sm:$0xff]
  %v74 = vld [vmem:[%s1 + $0x50] sm:$0xff]
  %v75 = vld [vmem:[%s1 + $0x58] sm:$0xff]
  %v76 = vld [vmem:[%s1 + $0x60] sm:$0xff]
  %v77 = vld [vmem:[%s1 + $0x68] sm:$0xff]
  %v78 = vld [vmem:[%s1 + $0x70] sm:$0xff]
  %v79 = vld [vmem:[%s1 + $0x78] sm:$0xff]
  %v80 = vld [vmem:[%s1 + $0x80] sm:$0xff]
  %v81 = vld [vmem:[%s1 + $0x88] sm:$0xff]
  %v82 = vld [vmem:[%s1 + $0x90] sm:$0xff]
  %v83 = vld [vmem:[%s1 + $0x98] sm:$0xff]
  %v84 = vld [vmem:[%s1 + $0xa0] sm:$0xff]
  %v85 = vld [vmem:[%s1 + $0xa8] sm:$0xff]
  %v86 = vld [vmem:[%s1 + $0xb0] sm:$0xff]
  %v87 = vld [vmem:[%s1 + $0xb8] sm:$0xff]
  %v88 = vld [vmem:[%s1 + $0xc0] sm:$0xff]
  %v89 = vld [vmem:[%s1 + $0xc8] sm:$0xff]
  %v90 = vld [vmem:[%s1 + $0xd0] sm:$0xff]
  %v91 = vld [vmem:[%s1 + $0xd8] sm:$0xff]
  %v92 = vld [vmem:[%s1 + $0xe0] sm:$0xff]
  %v93 = vld [vmem:[%s1 + $0xe8] sm:$0xff]
  %v94 = vld [vmem:[%s1 + $0xf0] sm:$0xff]
  %v95 = vld [vmem:[%s1 + $0xf8] sm:$0xff]
  %v96 = vld [vmem:[%s2] sm:$0x1]
  %v98 = vlaneseq
  %v99 = vshrl.u32 %v98, 7
  %v100 = vsub.s32 0, %v99
  %v101 = vrot.slane %v96, %v100
  %103 = vmatprep.subr.mxu0 0.0
  %104 = vmatpush1.msra.mxu0 %v64
  %105 = vmatprep.subr.mxu0 0.0
  %106 = vmatpush1.msra.mxu0 %v65
  %107 = vmatprep.subr.mxu0 0.0
  %108 = vmatpush1.msra.mxu0 %v66
  %109 = vmatprep.subr.mxu0 0.0
  %110 = vmatpush1.msra.mxu0 %v67
  %111 = vmatprep.subr.mxu0 0.0
  %112 = vmatpush1.msra.mxu0 %v68
  %113 = vmatprep.subr.mxu0 0.0
  %114 = vmatpush1.msra.mxu0 %v69
  %115 = vmatprep.subr.mxu0 0.0
  %116 = vmatpush1.msra.mxu0 %v70
  %117 = vmatprep.subr.mxu0 0.0
  %118 = vmatpush1.msra.mxu0 %v71
  %119 = vmatprep.subr.mxu0 0.0
  %120 = vmatpush1.msra.mxu0 %v72
  %121 = vmatprep.subr.mxu0 0.0
  %122 = vmatpush1.msra.mxu0 %v73
  %123 = vmatprep.subr.mxu0 0.0
  %124 = vmatpush1.msra.mxu0 %v74
  %125 = vmatprep.subr.mxu0 0.0
  %126 = vmatpush1.msra.mxu0 %v75
  %127 = vmatprep.subr.mxu0 0.0
  %128 = vmatpush1.msra.mxu0 %v76
  %129 = vmatprep.subr.mxu0 0.0
  %130 = vmatpush1.msra.mxu0 %v77
  %131 = vmatprep.subr.mxu0 0.0
  %132 = vmatpush1.msra.mxu0 %v78
  %133 = vmatprep.subr.mxu0 0.0
  %134 = vmatpush1.msra.mxu0 %v79
  %135 = vmatprep.subr.mxu0 0.0
  %136 = vmatpush1.msra.mxu0 %v80
  %137 = vmatprep.subr.mxu0 0.0
  %138 = vmatpush1.msra.mxu0 %v81
  %139 = vmatprep.subr.mxu0 0.0
  %140 = vmatpush1.msra.mxu0 %v82
  %141 = vmatprep.subr.mxu0 0.0
  %142 = vmatpush1.msra.mxu0 %v83
  %143 = vmatprep.subr.mxu0 0.0
  %144 = vmatpush1.msra.mxu0 %v84
  %145 = vmatprep.subr.mxu0 0.0
  %146 = vmatpush1.msra.mxu0 %v85
  %147 = vmatprep.subr.mxu0 0.0
  %148 = vmatpush1.msra.mxu0 %v86
  %149 = vmatprep.subr.mxu0 0.0
  %150 = vmatpush1.msra.mxu0 %v87
  %151 = vmatprep.subr.mxu0 0.0
  %152 = vmatpush1.msra.mxu0 %v88
  %153 = vmatprep.subr.mxu0 0.0
  %154 = vmatpush1.msra.mxu0 %v89
  %155 = vmatprep.subr.mxu0 0.0
  %156 = vmatpush1.msra.mxu0 %v90
  %157 = vmatprep.subr.mxu0 0.0
  %158 = vmatpush1.msra.mxu0 %v91
  %159 = vmatprep.subr.mxu0 0.0
  %160 = vmatpush1.msra.mxu0 %v92
  %161 = vmatprep.subr.mxu0 0.0
  %162 = vmatpush1.msra.mxu0 %v93
  %163 = vmatprep.subr.mxu0 0.0
  %164 = vmatpush1.msra.mxu0 %v94
  %165 = vmatprep.subr.mxu0 0.0
  %166 = vmatpush1.msra.mxu0 %v95
  %167 = vmatprep.mubr.f32.mxu0 %v15
  %168 = vmatmul.mubr.f32.gmra.mrb[0].mxu0 %v14
  %v169 = vpop.f32.mrb[0].mxu0
  %v170 = vadd.f32 %v101, %v169
  %v171 = vpop.f32.mrb[0].mxu0
  %172 = vmatprep.mubr.f32.mxu0 %v17
  %173 = vmatmul.mubr.f32.gmra.mrb[0].mxu0 %v16
  %v174 = vpop.f32.mrb[0].mxu0
  %v175 = vadd.f32 %v101, %v174
  %v176 = vpop.f32.mrb[0].mxu0
  %177 = vmatprep.mubr.f32.mxu0 %v19
  %178 = vmatmul.mubr.f32.gmra.mrb[0].mxu0 %v18
  %v179 = vpop.f32.mrb[0].mxu0
  %v180 = vadd.f32 %v101, %v179
  %v181 = vpop.f32.mrb[0].mxu0
  %182 = vmatprep.mubr.f32.mxu0 %v21
  %183 = vmatmul.mubr.f32.gmra.mrb[0].mxu0 %v20
  %v184 = vpop.f32.mrb[0].mxu0
  %v185 = vadd.f32 %v101, %v184
  %v186 = vpop.f32.mrb[0].mxu0
  %187 = vmatprep.mubr.f32.mxu0 %v23
  %188 = vmatmul.mubr.f32.gmra.mrb[0].mxu0 %v22
  %v189 = vpop.f32.mrb[0].mxu0
  %v190 = vadd.f32 %v101, %v189
  %v191 = vpop.f32.mrb[0].mxu0
  %192 = vmatprep.mubr.f32.mxu0 %v25
  %193 = vmatmul.mubr.f32.gmra.mrb[0].mxu0 %v24
  %v194 = vpop.f32.mrb[0].mxu0
  %v195 = vadd.f32 %v101, %v194
  %v196 = vpop.f32.mrb[0].mxu0
  %197 = vmatprep.mubr.f32.mxu0 %v27
  %198 = vmatmul.mubr.f32.gmra.mrb[0].mxu0 %v26
  %v199 = vpop.f32.mrb[0].mxu0
  %v200 = vadd.f32 %v101, %v199
  %v201 = vpop.f32.mrb[0].mxu0
  %202 = vmatprep.mubr.f32.mxu0 %v29
  %203 = vmatmul.mubr.f32.gmra.mrb[0].mxu0 %v28
  %v204 = vpop.f32.mrb[0].mxu0
  %v205 = vadd.f32 %v101, %v204
  %v206 = vpop.f32.mrb[0].mxu0
  %207 = vmatprep.mubr.f32.mxu0 %v31
  %208 = vmatmul.mubr.f32.gmra.mrb[0].mxu0 %v30
  %v209 = vpop.f32.mrb[0].mxu0
  %v210 = vadd.f32 %v101, %v209
  %v211 = vpop.f32.mrb[0].mxu0
  %212 = vmatprep.mubr.f32.mxu0 %v33
  %213 = vmatmul.mubr.f32.gmra.mrb[0].mxu0 %v32
  %v214 = vpop.f32.mrb[0].mxu0
  %v215 = vadd.f32 %v101, %v214
  %v216 = vpop.f32.mrb[0].mxu0
  %217 = vmatprep.mubr.f32.mxu0 %v35
  %218 = vmatmul.mubr.f32.gmra.mrb[0].mxu0 %v34
  %v219 = vpop.f32.mrb[0].mxu0
  %v220 = vadd.f32 %v101, %v219
  %v221 = vpop.f32.mrb[0].mxu0
  %222 = vmatprep.mubr.f32.mxu0 %v37
  %223 = vmatmul.mubr.f32.gmra.mrb[0].mxu0 %v36
  %v224 = vpop.f32.mrb[0].mxu0
  %v225 = vadd.f32 %v101, %v224
  %v226 = vpop.f32.mrb[0].mxu0
  %227 = vmatprep.mubr.f32.mxu0 %v39
  %228 = vmatmul.mubr.f32.gmra.mrb[0].mxu0 %v38
  %v229 = vpop.f32.mrb[0].mxu0
  %v230 = vadd.f32 %v101, %v229
  %v231 = vpop.f32.mrb[0].mxu0
  %232 = vmatprep.mubr.f32.mxu0 %v41
  %233 = vmatmul.mubr.f32.gmra.mrb[0].mxu0 %v40
  %v234 = vpop.f32.mrb[0].mxu0
  %v235 = vadd.f32 %v101, %v234
  %v236 = vpop.f32.mrb[0].mxu0
  %237 = vmatprep.mubr.f32.mxu0 %v43
  %238 = vmatmul.mubr.f32.gmra.mrb[0].mxu0 %v42
  %v239 = vpop.f32.mrb[0].mxu0
  %v240 = vadd.f32 %v101, %v239
  %v241 = vpop.f32.mrb[0].mxu0
  %242 = vmatprep.mubr.f32.mxu0 %v45
  %243 = vmatmul.mubr.f32.gmra.mrb[0].mxu0 %v44
  %v244 = vpop.f32.mrb[0].mxu0
  %v245 = vadd.f32 %v101, %v244
  %v246 = vpop.f32.mrb[0].mxu0
  %247 = vmatprep.mubr.f32.mxu0 %v47
  %248 = vmatmul.mubr.f32.gmra.mrb[0].mxu0 %v46
  %v249 = vpop.f32.mrb[0].mxu0
  %v250 = vadd.f32 %v101, %v249
  %v251 = vpop.f32.mrb[0].mxu0
  %252 = vmatprep.mubr.f32.mxu0 %v49
  %253 = vmatmul.mubr.f32.gmra.mrb[0].mxu0 %v48
  %v254 = vpop.f32.mrb[0].mxu0
  %v255 = vadd.f32 %v101, %v254
  %v256 = vpop.f32.mrb[0].mxu0
  %257 = vmatprep.mubr.f32.mxu0 %v51
  %258 = vmatmul.mubr.f32.gmra.mrb[0].mxu0 %v50
  %v259 = vpop.f32.mrb[0].mxu0
  %v260 = vadd.f32 %v101, %v259
  %v261 = vpop.f32.mrb[0].mxu0
  %262 = vmatprep.mubr.f32.mxu0 %v53
  %263 = vmatmul.mubr.f32.gmra.mrb[0].mxu0 %v52
  %v264 = vpop.f32.mrb[0].mxu0
  %v265 = vadd.f32 %v101, %v264
  %v266 = vpop.f32.mrb[0].mxu0
  %267 = vmatprep.mubr.f32.mxu0 %v55
  %268 = vmatmul.mubr.f32.gmra.mrb[0].mxu0 %v54
  %v269 = vpop.f32.mrb[0].mxu0
  %v270 = vadd.f32 %v101, %v269
  %v271 = vpop.f32.mrb[0].mxu0
  %272 = vmatprep.mubr.f32.mxu0 %v57
  %273 = vmatmul.mubr.f32.gmra.mrb[0].mxu0 %v56
  %v274 = vpop.f32.mrb[0].mxu0
  %v275 = vadd.f32 %v101, %v274
  %v276 = vpop.f32.mrb[0].mxu0
  %277 = vmatprep.mubr.f32.mxu0 %v59
  %278 = vmatmul.mubr.f32.gmra.mrb[0].mxu0 %v58
  %v279 = vpop.f32.mrb[0].mxu0
  %v280 = vadd.f32 %v101, %v279
  %v281 = vpop.f32.mrb[0].mxu0
  %282 = vmatprep.mubr.f32.mxu0 %v61
  %283 = vmatmul.mubr.f32.gmra.mrb[0].mxu0 %v60
  %v284 = vpop.f32.mrb[0].mxu0
  %v285 = vadd.f32 %v101, %v284
  %v286 = vpop.f32.mrb[0].mxu0
  %287 = vmatprep.mubr.f32.mxu0 %v63
  %288 = vmatmul.mubr.f32.gmra.mrb[0].mxu0 %v62
  %v289 = vpop.f32.mrb[0].mxu0
  %v290 = vadd.f32 %v101, %v289
  %v291 = vpop.f32.mrb[0].mxu0
  %292 = vdwg.mxu0
  %v293 = vmax.f32 %v170, 0.0
  %v294 = vmax.f32 %v175, 0.0
  %v295 = vmax.f32 %v180, 0.0
  %v296 = vmax.f32 %v185, 0.0
  %v297 = vmax.f32 %v190, 0.0
  %v298 = vmax.f32 %v195, 0.0
  %v299 = vmax.f32 %v200, 0.0
  %v300 = vmax.f32 %v205, 0.0
  %v301 = vmax.f32 %v210, 0.0
  %v302 = vmax.f32 %v215, 0.0
  %v303 = vmax.f32 %v220, 0.0
  %v304 = vmax.f32 %v225, 0.0
  %v305 = vmax.f32 %v230, 0.0
  %v306 = vmax.f32 %v235, 0.0
  %v307 = vmax.f32 %v240, 0.0
  %v308 = vmax.f32 %v245, 0.0
  %v309 = vmax.f32 %v250, 0.0
  %v310 = vmax.f32 %v255, 0.0
  %v311 = vmax.f32 %v260, 0.0
  %v312 = vmax.f32 %v265, 0.0
  %v313 = vmax.f32 %v270, 0.0
  %v314 = vmax.f32 %v275, 0.0
  %v315 = vmax.f32 %v280, 0.0
  %v316 = vmax.f32 %v285, 0.0
  %v317 = vmax.f32 %v290, 0.0
  %318 = vst [vmem:[%s3] sm:$0xff] %v293
  %319 = vst [vmem:[%s3 + $0x8] sm:$0xff] %v294
  %320 = vst [vmem:[%s3 + $0x10] sm:$0xff] %v295
  %321 = vst [vmem:[%s3 + $0x18] sm:$0xff] %v296
  %322 = vst [vmem:[%s3 + $0x20] sm:$0xff] %v297
  %323 = vst [vmem:[%s3 + $0x28] sm:$0xff] %v298
  %324 = vst [vmem:[%s3 + $0x30] sm:$0xff] %v299
  %325 = vst [vmem:[%s3 + $0x38] sm:$0xff] %v300
  %326 = vst [vmem:[%s3 + $0x40] sm:$0xff] %v301
  %327 = vst [vmem:[%s3 + $0x48] sm:$0xff] %v302
  %328 = vst [vmem:[%s3 + $0x50] sm:$0xff] %v303
  %329 = vst [vmem:[%s3 + $0x58] sm:$0xff] %v304
  %330 = vst [vmem:[%s3 + $0x60] sm:$0xff] %v305
  %331 = vst [vmem:[%s3 + $0x68] sm:$0xff] %v306
  %332 = vst [vmem:[%s3 + $0x70] sm:$0xff] %v307
  %333 = vst [vmem:[%s3 + $0x78] sm:$0xff] %v308
  %334 = vst [vmem:[%s3 + $0x80] sm:$0xff] %v309
  %335 = vst [vmem:[%s3 + $0x88] sm:$0xff] %v310
  %336 = vst [vmem:[%s3 + $0x90] sm:$0xff] %v311
  %337 = vst [vmem:[%s3 + $0x98] sm:$0xff] %v312
  %338 = vst [vmem:[%s3 + $0xa0] sm:$0xff] %v313
  %339 = vst [vmem:[%s3 + $0xa8] sm:$0xff] %v314
  %340 = vst [vmem:[%s3 + $0xb0] sm:$0xff] %v315
  %341 = vst [vmem:[%s3 + $0xb8] sm:$0xff] %v316
  %342 = vst [vmem:[%s3 + $0xc0] sm:$0xff] %v317
  // Predicated region
  $region14: #{cnn_forward.9} parent=0 // pred_check
    _
  $region15: #{cnn_forward.9} parent=0 // pred_check_branch
    %344 = sbr.rel (0) target = $region17
  $region16: #{cnn_forward.9} parent=0 // pred_region
    _
  $region17: #{cnn_forward.9} parent=0 // pred_fallthru
    _
  // Predicated region
  $region18: #{cnn_forward.9} parent=0 // pred_check
    _
  $region19: #{cnn_forward.9} parent=0 // pred_check_branch
    %346 = sbr.rel (0) target = $region21
  $region20: #{cnn_forward.9} parent=0 // pred_region
    _
  $region21: #{cnn_forward.9} parent=0 // pred_fallthru
    _

// kernel: cnn_forward.10
$region0: #{cnn_forward.10}
  #allocation0 [shape = 'u32[]', space=smem, size = 0x4, offset = 0x4, fixed_abs, tag = 'smem constant byte address 0x4 - core index']
  #allocation1 [shape = 'u32[144,128]{1,0:T(1,128)}', space=vmem, size = 0x12000, scoped, tag = 'internal scratch']
  %s0 = inlined_call_operand.vmem [shape: f32[50,128], index: 0, kind: input, shape index: {}]
  %s1 = inlined_call_operand.vmem [shape: f32[50,128], index: 1, kind: input, shape index: {}]
  %s2 = inlined_call_operand.vmem [shape: f32[50,128], index: 2, kind: input, shape index: {}]
  %s3 = inlined_call_operand.vmem [shape: f32[50,128], index: 3, kind: input, shape index: {}]
  %s4 = inlined_call_operand.vmem [shape: f32[50,128], index: 4, kind: output, shape index: {}]
  %s5 = sld [smem:[#allocation0]]
  $region26: #{cnn_forward.10} parent=0
    _
  %s7 = ssub.s32 1, %s5
  %s8 = scalar_select 0, %s7, %s5
  // Predicated region
  $region2: #{cnn_forward.10} parent=0 // pred_check
    _
  $region3: #{cnn_forward.10} parent=0 // pred_check_branch
    %10 = sbr.rel (0) target = $region5
  $region4: #{cnn_forward.10} parent=0 // pred_region
    _
  $region5: #{cnn_forward.10} parent=0 // pred_fallthru
    _
  // Predicated region
  $region6: #{cnn_forward.10} parent=0 // pred_check
    _
  $region7: #{cnn_forward.10} parent=0 // pred_check_branch
    %12 = sbr.rel (0) target = $region9
  $region8: #{cnn_forward.10} parent=0 // pred_region
    _
  $region9: #{cnn_forward.10} parent=0 // pred_fallthru
    _
  // Predicated region
  $region10: #{cnn_forward.10} parent=0 // pred_check
    _
  $region11: #{cnn_forward.10} parent=0 // pred_check_branch
    %14 = sbr.rel (0) target = $region13
  $region12: #{cnn_forward.10} parent=0 // pred_region
    _
  $region13: #{cnn_forward.10} parent=0 // pred_fallthru
    _
  // Predicated region
  $region14: #{cnn_forward.10} parent=0 // pred_check
    _
  $region15: #{cnn_forward.10} parent=0 // pred_check_branch
    %16 = sbr.rel (0) target = $region17
  $region16: #{cnn_forward.10} parent=0 // pred_region
    _
  $region17: #{cnn_forward.10} parent=0 // pred_fallthru
    _
  %v17 = vld [vmem:[%s0] sm:$0xff]
  %v18 = vld [vmem:[%s0 + $0x8] sm:$0xff]
  %v19 = vld [vmem:[%s0 + $0x10] sm:$0xff]
  %v20 = vld [vmem:[%s0 + $0x18] sm:$0xff]
  %v21 = vld [vmem:[%s0 + $0x20] sm:$0xff]
  %v22 = vld [vmem:[%s0 + $0x28] sm:$0xff]
  %v23 = vld [vmem:[%s0 + $0x30] sm:$0x3]
  %v24 = vld [vmem:[%s1] sm:$0xff]
  %v25 = vld [vmem:[%s1 + $0x8] sm:$0xff]
  %v26 = vld [vmem:[%s1 + $0x10] sm:$0xff]
  %v27 = vld [vmem:[%s1 + $0x18] sm:$0xff]
  %v28 = vld [vmem:[%s1 + $0x20] sm:$0xff]
  %v29 = vld [vmem:[%s1 + $0x28] sm:$0xff]
  %v30 = vld [vmem:[%s1 + $0x30] sm:$0x3]
  %v31 = vmax.f32 %v17, %v24
  %v32 = vmax.f32 %v18, %v25
  %v33 = vmax.f32 %v19, %v26
  %v34 = vmax.f32 %v20, %v27
  %v35 = vmax.f32 %v21, %v28
  %v36 = vmax.f32 %v22, %v29
  %v37 = vmax.f32 %v23, %v30
  %v38 = vld [vmem:[%s2] sm:$0xff]
  %v39 = vld [vmem:[%s2 + $0x8] sm:$0xff]
  %v40 = vld [vmem:[%s2 + $0x10] sm:$0xff]
  %v41 = vld [vmem:[%s2 + $0x18] sm:$0xff]
  %v42 = vld [vmem:[%s2 + $0x20] sm:$0xff]
  %v43 = vld [vmem:[%s2 + $0x28] sm:$0xff]
  %v44 = vld [vmem:[%s2 + $0x30] sm:$0x3]
  %v45 = vld [vmem:[%s3] sm:$0xff]
  %v46 = vld [vmem:[%s3 + $0x8] sm:$0xff]
  %v47 = vld [vmem:[%s3 + $0x10] sm:$0xff]
  %v48 = vld [vmem:[%s3 + $0x18] sm:$0xff]
  %v49 = vld [vmem:[%s3 + $0x20] sm:$0xff]
  %v50 = vld [vmem:[%s3 + $0x28] sm:$0xff]
  %v51 = vld [vmem:[%s3 + $0x30] sm:$0x3]
  %v52 = vmax.f32 %v38, %v45
  %v53 = vmax.f32 %v39, %v46
  %v54 = vmax.f32 %v40, %v47
  %v55 = vmax.f32 %v41, %v48
  %v56 = vmax.f32 %v42, %v49
  %v57 = vmax.f32 %v43, %v50
  %v58 = vmax.f32 %v44, %v51
  %v59 = vmax.f32 %v31, %v52
  %v60 = vmax.f32 %v32, %v53
  %v61 = vmax.f32 %v33, %v54
  %v62 = vmax.f32 %v34, %v55
  %v63 = vmax.f32 %v35, %v56
  %v64 = vmax.f32 %v36, %v57
  %v65 = vmax.f32 %v37, %v58
  %66 = vst [vmem:[%s4] sm:$0xff] %v59
  %67 = vst [vmem:[%s4 + $0x8] sm:$0xff] %v60
  %68 = vst [vmem:[%s4 + $0x10] sm:$0xff] %v61
  %69 = vst [vmem:[%s4 + $0x18] sm:$0xff] %v62
  %70 = vst [vmem:[%s4 + $0x20] sm:$0xff] %v63
  %71 = vst [vmem:[%s4 + $0x28] sm:$0xff] %v64
  %72 = vst [vmem:[%s4 + $0x30] sm:$0x3] %v65
  // Predicated region
  $region18: #{cnn_forward.10} parent=0 // pred_check
    _
  $region19: #{cnn_forward.10} parent=0 // pred_check_branch
    %74 = sbr.rel (0) target = $region21
  $region20: #{cnn_forward.10} parent=0 // pred_region
    _
  $region21: #{cnn_forward.10} parent=0 // pred_fallthru
    _
  // Predicated region
  $region22: #{cnn_forward.10} parent=0 // pred_check
    _
  $region23: #{cnn_forward.10} parent=0 // pred_check_branch
    %76 = sbr.rel (0) target = $region25
  $region24: #{cnn_forward.10} parent=0 // pred_region
    _
  $region25: #{cnn_forward.10} parent=0 // pred_fallthru
    _

// kernel: cnn_forward.11
$region0: #{cnn_forward.11}
  #allocation0 [shape = 'u32[]', space=smem, size = 0x4, offset = 0x4, fixed_abs, tag = 'smem constant byte address 0x4 - core index']
  #allocation1 [shape = 'u32[144,128]{1,0:T(1,128)}', space=vmem, size = 0x12000, scoped, tag = 'internal scratch']
  %s0 = inlined_call_operand.vmem [shape: f32[8,512], index: 0, kind: input, shape index: {}]
  %s1 = inlined_call_operand.vmem [shape: f32[512,128], index: 1, kind: input, shape index: {}]
  %s2 = inlined_call_operand.vmem [shape: f32[1,128], index: 2, kind: input, shape index: {}]
  %s3 = inlined_call_operand.vmem [shape: f32[8,128], index: 3, kind: output, shape index: {}]
  %s4 = sld [smem:[#allocation0]]
  $region22: #{cnn_forward.11} parent=0
    _
  %s6 = ssub.s32 1, %s4
  %s7 = scalar_select 0, %s6, %s4
  // Predicated region
  $region2: #{cnn_forward.11} parent=0 // pred_check
    _
  $region3: #{cnn_forward.11} parent=0 // pred_check_branch
    %9 = sbr.rel (0) target = $region5
  $region4: #{cnn_forward.11} parent=0 // pred_region
    _
  $region5: #{cnn_forward.11} parent=0 // pred_fallthru
    _
  // Predicated region
  $region6: #{cnn_forward.11} parent=0 // pred_check
    _
  $region7: #{cnn_forward.11} parent=0 // pred_check_branch
    %11 = sbr.rel (0) target = $region9
  $region8: #{cnn_forward.11} parent=0 // pred_region
    _
  $region9: #{cnn_forward.11} parent=0 // pred_fallthru
    _
  // Predicated region
  $region10: #{cnn_forward.11} parent=0 // pred_check
    _
  $region11: #{cnn_forward.11} parent=0 // pred_check_branch
    %13 = sbr.rel (0) target = $region13
  $region12: #{cnn_forward.11} parent=0 // pred_region
    _
  $region13: #{cnn_forward.11} parent=0 // pred_fallthru
    _
  %v14 = vld [vmem:[%s0] sm:$0xff]
  %v15 = vld [vmem:[%s0 + $0x8] sm:$0xff]
  %v16 = vld [vmem:[%s0 + $0x10] sm:$0xff]
  %v17 = vld [vmem:[%s0 + $0x18] sm:$0xff]
  %v18 = vld [vmem:[%s1] sm:$0xff]
  %v19 = vld [vmem:[%s1 + $0x8] sm:$0xff]
  %v20 = vld [vmem:[%s1 + $0x10] sm:$0xff]
  %v21 = vld [vmem:[%s1 + $0x18] sm:$0xff]
  %v22 = vld [vmem:[%s1 + $0x20] sm:$0xff]
  %v23 = vld [vmem:[%s1 + $0x28] sm:$0xff]
  %v24 = vld [vmem:[%s1 + $0x30] sm:$0xff]
  %v25 = vld [vmem:[%s1 + $0x38] sm:$0xff]
  %v26 = vld [vmem:[%s1 + $0x40] sm:$0xff]
  %v27 = vld [vmem:[%s1 + $0x48] sm:$0xff]
  %v28 = vld [vmem:[%s1 + $0x50] sm:$0xff]
  %v29 = vld [vmem:[%s1 + $0x58] sm:$0xff]
  %v30 = vld [vmem:[%s1 + $0x60] sm:$0xff]
  %v31 = vld [vmem:[%s1 + $0x68] sm:$0xff]
  %v32 = vld [vmem:[%s1 + $0x70] sm:$0xff]
  %v33 = vld [vmem:[%s1 + $0x78] sm:$0xff]
  %v34 = vld [vmem:[%s1 + $0x80] sm:$0xff]
  %v35 = vld [vmem:[%s1 + $0x88] sm:$0xff]
  %v36 = vld [vmem:[%s1 + $0x90] sm:$0xff]
  %v37 = vld [vmem:[%s1 + $0x98] sm:$0xff]
  %v38 = vld [vmem:[%s1 + $0xa0] sm:$0xff]
  %v39 = vld [vmem:[%s1 + $0xa8] sm:$0xff]
  %v40 = vld [vmem:[%s1 + $0xb0] sm:$0xff]
  %v41 = vld [vmem:[%s1 + $0xb8] sm:$0xff]
  %v42 = vld [vmem:[%s1 + $0xc0] sm:$0xff]
  %v43 = vld [vmem:[%s1 + $0xc8] sm:$0xff]
  %v44 = vld [vmem:[%s1 + $0xd0] sm:$0xff]
  %v45 = vld [vmem:[%s1 + $0xd8] sm:$0xff]
  %v46 = vld [vmem:[%s1 + $0xe0] sm:$0xff]
  %v47 = vld [vmem:[%s1 + $0xe8] sm:$0xff]
  %v48 = vld [vmem:[%s1 + $0xf0] sm:$0xff]
  %v49 = vld [vmem:[%s1 + $0xf8] sm:$0xff]
  %v50 = vld [vmem:[%s1 + $0x100] sm:$0xff]
  %v51 = vld [vmem:[%s1 + $0x108] sm:$0xff]
  %v52 = vld [vmem:[%s1 + $0x110] sm:$0xff]
  %v53 = vld [vmem:[%s1 + $0x118] sm:$0xff]
  %v54 = vld [vmem:[%s1 + $0x120] sm:$0xff]
  %v55 = vld [vmem:[%s1 + $0x128] sm:$0xff]
  %v56 = vld [vmem:[%s1 + $0x130] sm:$0xff]
  %v57 = vld [vmem:[%s1 + $0x138] sm:$0xff]
  %v58 = vld [vmem:[%s1 + $0x140] sm:$0xff]
  %v59 = vld [vmem:[%s1 + $0x148] sm:$0xff]
  %v60 = vld [vmem:[%s1 + $0x150] sm:$0xff]
  %v61 = vld [vmem:[%s1 + $0x158] sm:$0xff]
  %v62 = vld [vmem:[%s1 + $0x160] sm:$0xff]
  %v63 = vld [vmem:[%s1 + $0x168] sm:$0xff]
  %v64 = vld [vmem:[%s1 + $0x170] sm:$0xff]
  %v65 = vld [vmem:[%s1 + $0x178] sm:$0xff]
  %v66 = vld [vmem:[%s1 + $0x180] sm:$0xff]
  %v67 = vld [vmem:[%s1 + $0x188] sm:$0xff]
  %v68 = vld [vmem:[%s1 + $0x190] sm:$0xff]
  %v69 = vld [vmem:[%s1 + $0x198] sm:$0xff]
  %v70 = vld [vmem:[%s1 + $0x1a0] sm:$0xff]
  %v71 = vld [vmem:[%s1 + $0x1a8] sm:$0xff]
  %v72 = vld [vmem:[%s1 + $0x1b0] sm:$0xff]
  %v73 = vld [vmem:[%s1 + $0x1b8] sm:$0xff]
  %v74 = vld [vmem:[%s1 + $0x1c0] sm:$0xff]
  %v75 = vld [vmem:[%s1 + $0x1c8] sm:$0xff]
  %v76 = vld [vmem:[%s1 + $0x1d0] sm:$0xff]
  %v77 = vld [vmem:[%s1 + $0x1d8] sm:$0xff]
  %v78 = vld [vmem:[%s1 + $0x1e0] sm:$0xff]
  %v79 = vld [vmem:[%s1 + $0x1e8] sm:$0xff]
  %v80 = vld [vmem:[%s1 + $0x1f0] sm:$0xff]
  %v81 = vld [vmem:[%s1 + $0x1f8] sm:$0xff]
  %v82 = vld [vmem:[%s2] sm:$0x1]
  %v84 = vlaneseq
  %v85 = vshrl.u32 %v84, 7
  %v86 = vsub.s32 0, %v85
  %v87 = vrot.slane %v82, %v86
  %89 = vmatprep.subr.mxu0 0.0
  %90 = vmatpush1.msra.mxu0 %v18
  %91 = vmatprep.subr.mxu0 0.0
  %92 = vmatpush1.msra.mxu0 %v19
  %93 = vmatprep.subr.mxu0 0.0
  %94 = vmatpush1.msra.mxu0 %v20
  %95 = vmatprep.subr.mxu0 0.0
  %96 = vmatpush1.msra.mxu0 %v21
  %97 = vmatprep.subr.mxu0 0.0
  %98 = vmatpush1.msra.mxu0 %v22
  %99 = vmatprep.subr.mxu0 0.0
  %100 = vmatpush1.msra.mxu0 %v23
  %101 = vmatprep.subr.mxu0 0.0
  %102 = vmatpush1.msra.mxu0 %v24
  %103 = vmatprep.subr.mxu0 0.0
  %104 = vmatpush1.msra.mxu0 %v25
  %105 = vmatprep.subr.mxu0 0.0
  %106 = vmatpush1.msra.mxu0 %v26
  %107 = vmatprep.subr.mxu0 0.0
  %108 = vmatpush1.msra.mxu0 %v27
  %109 = vmatprep.subr.mxu0 0.0
  %110 = vmatpush1.msra.mxu0 %v28
  %111 = vmatprep.subr.mxu0 0.0
  %112 = vmatpush1.msra.mxu0 %v29
  %113 = vmatprep.subr.mxu0 0.0
  %114 = vmatpush1.msra.mxu0 %v30
  %115 = vmatprep.subr.mxu0 0.0
  %116 = vmatpush1.msra.mxu0 %v31
  %117 = vmatprep.subr.mxu0 0.0
  %118 = vmatpush1.msra.mxu0 %v32
  %119 = vmatprep.subr.mxu0 0.0
  %120 = vmatpush1.msra.mxu0 %v33
  %121 = vmatprep.subr.mxu0 0.0
  %122 = vmatpush1.msra.mxu0 %v34
  %123 = vmatprep.subr.mxu0 0.0
  %124 = vmatpush1.msra.mxu0 %v35
  %125 = vmatprep.subr.mxu0 0.0
  %126 = vmatpush1.msra.mxu0 %v36
  %127 = vmatprep.subr.mxu0 0.0
  %128 = vmatpush1.msra.mxu0 %v37
  %129 = vmatprep.subr.mxu0 0.0
  %130 = vmatpush1.msra.mxu0 %v38
  %131 = vmatprep.subr.mxu0 0.0
  %132 = vmatpush1.msra.mxu0 %v39
  %133 = vmatprep.subr.mxu0 0.0
  %134 = vmatpush1.msra.mxu0 %v40
  %135 = vmatprep.subr.mxu0 0.0
  %136 = vmatpush1.msra.mxu0 %v41
  %137 = vmatprep.subr.mxu0 0.0
  %138 = vmatpush1.msra.mxu0 %v42
  %139 = vmatprep.subr.mxu0 0.0
  %140 = vmatpush1.msra.mxu0 %v43
  %141 = vmatprep.subr.mxu0 0.0
  %142 = vmatpush1.msra.mxu0 %v44
  %143 = vmatprep.subr.mxu0 0.0
  %144 = vmatpush1.msra.mxu0 %v45
  %145 = vmatprep.subr.mxu0 0.0
  %146 = vmatpush1.msra.mxu0 %v46
  %147 = vmatprep.subr.mxu0 0.0
  %148 = vmatpush1.msra.mxu0 %v47
  %149 = vmatprep.subr.mxu0 0.0
  %150 = vmatpush1.msra.mxu0 %v48
  %151 = vmatprep.subr.mxu0 0.0
  %152 = vmatpush1.msra.mxu0 %v49
  %153 = vmatprep.mubr.f32.mxu0 %v15
  %154 = vmatmul.mubr.f32.gmra.mrb[0].mxu0 %v14
  %v155 = vpop.f32.mrb[0].mxu0
  %v156 = vadd.f32 %v87, %v155
  %v157 = vpop.f32.mrb[0].mxu0
  %158 = vdwg.mxu0
  %159 = vmatprep.subr.mxu0 0.0
  %160 = vmatpush1.msra.mxu0 %v50
  %161 = vmatprep.subr.mxu0 0.0
  %162 = vmatpush1.msra.mxu0 %v51
  %163 = vmatprep.subr.mxu0 0.0
  %164 = vmatpush1.msra.mxu0 %v52
  %165 = vmatprep.subr.mxu0 0.0
  %166 = vmatpush1.msra.mxu0 %v53
  %167 = vmatprep.subr.mxu0 0.0
  %168 = vmatpush1.msra.mxu0 %v54
  %169 = vmatprep.subr.mxu0 0.0
  %170 = vmatpush1.msra.mxu0 %v55
  %171 = vmatprep.subr.mxu0 0.0
  %172 = vmatpush1.msra.mxu0 %v56
  %173 = vmatprep.subr.mxu0 0.0
  %174 = vmatpush1.msra.mxu0 %v57
  %175 = vmatprep.subr.mxu0 0.0
  %176 = vmatpush1.msra.mxu0 %v58
  %177 = vmatprep.subr.mxu0 0.0
  %178 = vmatpush1.msra.mxu0 %v59
  %179 = vmatprep.subr.mxu0 0.0
  %180 = vmatpush1.msra.mxu0 %v60
  %181 = vmatprep.subr.mxu0 0.0
  %182 = vmatpush1.msra.mxu0 %v61
  %183 = vmatprep.subr.mxu0 0.0
  %184 = vmatpush1.msra.mxu0 %v62
  %185 = vmatprep.subr.mxu0 0.0
  %186 = vmatpush1.msra.mxu0 %v63
  %187 = vmatprep.subr.mxu0 0.0
  %188 = vmatpush1.msra.mxu0 %v64
  %189 = vmatprep.subr.mxu0 0.0
  %190 = vmatpush1.msra.mxu0 %v65
  %191 = vmatprep.subr.mxu0 0.0
  %192 = vmatpush1.msra.mxu0 %v66
  %193 = vmatprep.subr.mxu0 0.0
  %194 = vmatpush1.msra.mxu0 %v67
  %195 = vmatprep.subr.mxu0 0.0
  %196 = vmatpush1.msra.mxu0 %v68
  %197 = vmatprep.subr.mxu0 0.0
  %198 = vmatpush1.msra.mxu0 %v69
  %199 = vmatprep.subr.mxu0 0.0
  %200 = vmatpush1.msra.mxu0 %v70
  %201 = vmatprep.subr.mxu0 0.0
  %202 = vmatpush1.msra.mxu0 %v71
  %203 = vmatprep.subr.mxu0 0.0
  %204 = vmatpush1.msra.mxu0 %v72
  %205 = vmatprep.subr.mxu0 0.0
  %206 = vmatpush1.msra.mxu0 %v73
  %207 = vmatprep.subr.mxu0 0.0
  %208 = vmatpush1.msra.mxu0 %v74
  %209 = vmatprep.subr.mxu0 0.0
  %210 = vmatpush1.msra.mxu0 %v75
  %211 = vmatprep.subr.mxu0 0.0
  %212 = vmatpush1.msra.mxu0 %v76
  %213 = vmatprep.subr.mxu0 0.0
  %214 = vmatpush1.msra.mxu0 %v77
  %215 = vmatprep.subr.mxu0 0.0
  %216 = vmatpush1.msra.mxu0 %v78
  %217 = vmatprep.subr.mxu0 0.0
  %218 = vmatpush1.msra.mxu0 %v79
  %219 = vmatprep.subr.mxu0 0.0
  %220 = vmatpush1.msra.mxu0 %v80
  %221 = vmatprep.subr.mxu0 0.0
  %222 = vmatpush1.msra.mxu0 %v81
  %223 = vmatprep.mubr.f32.mxu0 %v17
  %224 = vmatmul.mubr.f32.gmra.mrb[0].mxu0 %v16
  %v225 = vpop.f32.mrb[0].mxu0
  %v226 = vadd.f32 %v156, %v225
  %v227 = vpop.f32.mrb[0].mxu0
  %228 = vdwg.mxu0
  %v229 = vmax.f32 %v226, 0.0
  %230 = vst [vmem:[%s3] sm:$0xff] %v229
  // Predicated region
  $region14: #{cnn_forward.11} parent=0 // pred_check
    _
  $region15: #{cnn_forward.11} parent=0 // pred_check_branch
    %232 = sbr.rel (0) target = $region17
  $region16: #{cnn_forward.11} parent=0 // pred_region
    _
  $region17: #{cnn_forward.11} parent=0 // pred_fallthru
    _
  // Predicated region
  $region18: #{cnn_forward.11} parent=0 // pred_check
    _
  $region19: #{cnn_forward.11} parent=0 // pred_check_branch
    %234 = sbr.rel (0) target = $region21
  $region20: #{cnn_forward.11} parent=0 // pred_region
    _
  $region21: #{cnn_forward.11} parent=0 // pred_fallthru
    _

// kernel: cnn_forward.12
$region0: #{cnn_forward.12}
  #allocation0 [shape = 'u32[]', space=smem, size = 0x4, offset = 0x4, fixed_abs, tag = 'smem constant byte address 0x4 - core index']
  #allocation1 [shape = 'u32[144,128]{1,0:T(1,128)}', space=vmem, size = 0x12000, scoped, tag = 'internal scratch']
  %s0 = inlined_call_operand.vmem [shape: f32[8,128], index: 0, kind: input, shape index: {}]
  %s1 = inlined_call_operand.vmem [shape: f32[128,128], index: 1, kind: input, shape index: {}]
  %s2 = inlined_call_operand.vmem [shape: f32[1,128], index: 2, kind: input, shape index: {}]
  %s3 = inlined_call_operand.vmem [shape: f32[8,128], index: 3, kind: output, shape index: {}]
  %s4 = sld [smem:[#allocation0]]
  $region22: #{cnn_forward.12} parent=0
    _
  %s6 = ssub.s32 1, %s4
  %s7 = scalar_select 0, %s6, %s4
  // Predicated region
  $region2: #{cnn_forward.12} parent=0 // pred_check
    _
  $region3: #{cnn_forward.12} parent=0 // pred_check_branch
    %9 = sbr.rel (0) target = $region5
  $region4: #{cnn_forward.12} parent=0 // pred_region
    _
  $region5: #{cnn_forward.12} parent=0 // pred_fallthru
    _
  // Predicated region
  $region6: #{cnn_forward.12} parent=0 // pred_check
    _
  $region7: #{cnn_forward.12} parent=0 // pred_check_branch
    %11 = sbr.rel (0) target = $region9
  $region8: #{cnn_forward.12} parent=0 // pred_region
    _
  $region9: #{cnn_forward.12} parent=0 // pred_fallthru
    _
  // Predicated region
  $region10: #{cnn_forward.12} parent=0 // pred_check
    _
  $region11: #{cnn_forward.12} parent=0 // pred_check_branch
    %13 = sbr.rel (0) target = $region13
  $region12: #{cnn_forward.12} parent=0 // pred_region
    _
  $region13: #{cnn_forward.12} parent=0 // pred_fallthru
    _
  %v14 = vld [vmem:[%s0] sm:$0xff]
  %v15 = vld [vmem:[%s1] sm:$0xff]
  %v16 = vld [vmem:[%s1 + $0x8] sm:$0xff]
  %v17 = vld [vmem:[%s1 + $0x10] sm:$0xff]
  %v18 = vld [vmem:[%s1 + $0x18] sm:$0xff]
  %v19 = vld [vmem:[%s1 + $0x20] sm:$0xff]
  %v20 = vld [vmem:[%s1 + $0x28] sm:$0xff]
  %v21 = vld [vmem:[%s1 + $0x30] sm:$0xff]
  %v22 = vld [vmem:[%s1 + $0x38] sm:$0xff]
  %v23 = vld [vmem:[%s1 + $0x40] sm:$0xff]
  %v24 = vld [vmem:[%s1 + $0x48] sm:$0xff]
  %v25 = vld [vmem:[%s1 + $0x50] sm:$0xff]
  %v26 = vld [vmem:[%s1 + $0x58] sm:$0xff]
  %v27 = vld [vmem:[%s1 + $0x60] sm:$0xff]
  %v28 = vld [vmem:[%s1 + $0x68] sm:$0xff]
  %v29 = vld [vmem:[%s1 + $0x70] sm:$0xff]
  %v30 = vld [vmem:[%s1 + $0x78] sm:$0xff]
  %v31 = vld [vmem:[%s2] sm:$0x1]
  %v33 = vlaneseq
  %v34 = vshrl.u32 %v33, 7
  %v35 = vsub.s32 0, %v34
  %v36 = vrot.slane %v31, %v35
  %38 = vmatprep.subr.mxu0 0.0
  %39 = vmatpush1.msra.mxu0 %v15
  %40 = vmatprep.subr.mxu0 0.0
  %41 = vmatpush1.msra.mxu0 %v16
  %42 = vmatprep.subr.mxu0 0.0
  %43 = vmatpush1.msra.mxu0 %v17
  %44 = vmatprep.subr.mxu0 0.0
  %45 = vmatpush1.msra.mxu0 %v18
  %46 = vmatprep.subr.mxu0 0.0
  %47 = vmatpush1.msra.mxu0 %v19
  %48 = vmatprep.subr.mxu0 0.0
  %49 = vmatpush1.msra.mxu0 %v20
  %50 = vmatprep.subr.mxu0 0.0
  %51 = vmatpush1.msra.mxu0 %v21
  %52 = vmatprep.subr.mxu0 0.0
  %53 = vmatpush1.msra.mxu0 %v22
  %54 = vmatprep.subr.mxu0 0.0
  %55 = vmatpush1.msra.mxu0 %v23
  %56 = vmatprep.subr.mxu0 0.0
  %57 = vmatpush1.msra.mxu0 %v24
  %58 = vmatprep.subr.mxu0 0.0
  %59 = vmatpush1.msra.mxu0 %v25
  %60 = vmatprep.subr.mxu0 0.0
  %61 = vmatpush1.msra.mxu0 %v26
  %62 = vmatprep.subr.mxu0 0.0
  %63 = vmatpush1.msra.mxu0 %v27
  %64 = vmatprep.subr.mxu0 0.0
  %65 = vmatpush1.msra.mxu0 %v28
  %66 = vmatprep.subr.mxu0 0.0
  %67 = vmatpush1.msra.mxu0 %v29
  %68 = vmatprep.subr.mxu0 0.0
  %69 = vmatpush1.msra.mxu0 %v30
  %70 = vmatprep.subr.mxu0 0.0
  %71 = vmatpush1.msra.mxu0 0.0
  %72 = vmatprep.subr.mxu0 0.0
  %73 = vmatpush1.msra.mxu0 0.0
  %74 = vmatprep.subr.mxu0 0.0
  %75 = vmatpush1.msra.mxu0 0.0
  %76 = vmatprep.subr.mxu0 0.0
  %77 = vmatpush1.msra.mxu0 0.0
  %78 = vmatprep.subr.mxu0 0.0
  %79 = vmatpush1.msra.mxu0 0.0
  %80 = vmatprep.subr.mxu0 0.0
  %81 = vmatpush1.msra.mxu0 0.0
  %82 = vmatprep.subr.mxu0 0.0
  %83 = vmatpush1.msra.mxu0 0.0
  %84 = vmatprep.subr.mxu0 0.0
  %85 = vmatpush1.msra.mxu0 0.0
  %86 = vmatprep.subr.mxu0 0.0
  %87 = vmatpush1.msra.mxu0 0.0
  %88 = vmatprep.subr.mxu0 0.0
  %89 = vmatpush1.msra.mxu0 0.0
  %90 = vmatprep.subr.mxu0 0.0
  %91 = vmatpush1.msra.mxu0 0.0
  %92 = vmatprep.subr.mxu0 0.0
  %93 = vmatpush1.msra.mxu0 0.0
  %94 = vmatprep.subr.mxu0 0.0
  %95 = vmatpush1.msra.mxu0 0.0
  %96 = vmatprep.subr.mxu0 0.0
  %97 = vmatpush1.msra.mxu0 0.0
  %98 = vmatprep.subr.mxu0 0.0
  %99 = vmatpush1.msra.mxu0 0.0
  %100 = vmatprep.subr.mxu0 0.0
  %101 = vmatpush1.msra.mxu0 0.0
  %102 = vmatprep.mubr.f32.mxu0 0.0
  %103 = vmatmul.mubr.f32.gmra.mrb[0].mxu0 %v14
  %v104 = vpop.f32.mrb[0].mxu0
  %v105 = vadd.f32 %v36, %v104
  %v106 = vpop.f32.mrb[0].mxu0
  %107 = vdwg.mxu0
  %v108 = vmax.f32 %v105, 0.0
  %109 = vst [vmem:[%s3] sm:$0xff] %v108
  // Predicated region
  $region14: #{cnn_forward.12} parent=0 // pred_check
    _
  $region15: #{cnn_forward.12} parent=0 // pred_check_branch
    %111 = sbr.rel (0) target = $region17
  $region16: #{cnn_forward.12} parent=0 // pred_region
    _
  $region17: #{cnn_forward.12} parent=0 // pred_fallthru
    _
  // Predicated region
  $region18: #{cnn_forward.12} parent=0 // pred_check
    _
  $region19: #{cnn_forward.12} parent=0 // pred_check_branch
    %113 = sbr.rel (0) target = $region21
  $region20: #{cnn_forward.12} parent=0 // pred_region
    _
  $region21: #{cnn_forward.12} parent=0 // pred_fallthru
    _

// kernel: cnn_forward.13
$region0: #{cnn_forward.13}
  #allocation0 [shape = 'u32[]', space=smem, size = 0x4, offset = 0x4, fixed_abs, tag = 'smem constant byte address 0x4 - core index']
  #allocation1 [shape = 'u32[144,128]{1,0:T(1,128)}', space=vmem, size = 0x12000, scoped, tag = 'internal scratch']
  %s0 = inlined_call_operand.vmem [shape: f32[8,128], index: 0, kind: input, shape index: {}]
  %s1 = inlined_call_operand.vmem [shape: f32[128,128], index: 1, kind: input, shape index: {}]
  %s2 = inlined_call_operand.vmem [shape: f32[1,128], index: 2, kind: input, shape index: {}]
  %s3 = inlined_call_operand.vmem [shape: f32[8,128], index: 3, kind: output, shape index: {}]
  %s4 = sld [smem:[#allocation0]]
  $region22: #{cnn_forward.13} parent=0
    _
  %s6 = ssub.s32 1, %s4
  %s7 = scalar_select 0, %s6, %s4
  // Predicated region
  $region2: #{cnn_forward.13} parent=0 // pred_check
    _
  $region3: #{cnn_forward.13} parent=0 // pred_check_branch
    %9 = sbr.rel (0) target = $region5
  $region4: #{cnn_forward.13} parent=0 // pred_region
    _
  $region5: #{cnn_forward.13} parent=0 // pred_fallthru
    _
  // Predicated region
  $region6: #{cnn_forward.13} parent=0 // pred_check
    _
  $region7: #{cnn_forward.13} parent=0 // pred_check_branch
    %11 = sbr.rel (0) target = $region9
  $region8: #{cnn_forward.13} parent=0 // pred_region
    _
  $region9: #{cnn_forward.13} parent=0 // pred_fallthru
    _
  // Predicated region
  $region10: #{cnn_forward.13} parent=0 // pred_check
    _
  $region11: #{cnn_forward.13} parent=0 // pred_check_branch
    %13 = sbr.rel (0) target = $region13
  $region12: #{cnn_forward.13} parent=0 // pred_region
    _
  $region13: #{cnn_forward.13} parent=0 // pred_fallthru
    _
  %v14 = vld [vmem:[%s0] sm:$0xff]
  %v15 = vld [vmem:[%s1] sm:$0xff]
  %v16 = vld [vmem:[%s1 + $0x8] sm:$0xff]
  %v17 = vld [vmem:[%s1 + $0x10] sm:$0xff]
  %v18 = vld [vmem:[%s1 + $0x18] sm:$0xff]
  %v19 = vld [vmem:[%s1 + $0x20] sm:$0xff]
  %v20 = vld [vmem:[%s1 + $0x28] sm:$0xff]
  %v21 = vld [vmem:[%s1 + $0x30] sm:$0xff]
  %v22 = vld [vmem:[%s1 + $0x38] sm:$0xff]
  %v23 = vld [vmem:[%s1 + $0x40] sm:$0xff]
  %v24 = vld [vmem:[%s1 + $0x48] sm:$0xff]
  %v25 = vld [vmem:[%s1 + $0x50] sm:$0xff]
  %v26 = vld [vmem:[%s1 + $0x58] sm:$0xff]
  %v27 = vld [vmem:[%s1 + $0x60] sm:$0xff]
  %v28 = vld [vmem:[%s1 + $0x68] sm:$0xff]
  %v29 = vld [vmem:[%s1 + $0x70] sm:$0xff]
  %v30 = vld [vmem:[%s1 + $0x78] sm:$0xff]
  %v31 = vld [vmem:[%s2] sm:$0x1]
  %v33 = vlaneseq
  %v34 = vshrl.u32 %v33, 7
  %v35 = vsub.s32 0, %v34
  %v36 = vrot.slane %v31, %v35
  %38 = vmatprep.subr.mxu0 0.0
  %39 = vmatpush1.msra.mxu0 %v15
  %40 = vmatprep.subr.mxu0 0.0
  %41 = vmatpush1.msra.mxu0 %v16
  %42 = vmatprep.subr.mxu0 0.0
  %43 = vmatpush1.msra.mxu0 %v17
  %44 = vmatprep.subr.mxu0 0.0
  %45 = vmatpush1.msra.mxu0 %v18
  %46 = vmatprep.subr.mxu0 0.0
  %47 = vmatpush1.msra.mxu0 %v19
  %48 = vmatprep.subr.mxu0 0.0
  %49 = vmatpush1.msra.mxu0 %v20
  %50 = vmatprep.subr.mxu0 0.0
  %51 = vmatpush1.msra.mxu0 %v21
  %52 = vmatprep.subr.mxu0 0.0
  %53 = vmatpush1.msra.mxu0 %v22
  %54 = vmatprep.subr.mxu0 0.0
  %55 = vmatpush1.msra.mxu0 %v23
  %56 = vmatprep.subr.mxu0 0.0
  %57 = vmatpush1.msra.mxu0 %v24
  %58 = vmatprep.subr.mxu0 0.0
  %59 = vmatpush1.msra.mxu0 %v25
  %60 = vmatprep.subr.mxu0 0.0
  %61 = vmatpush1.msra.mxu0 %v26
  %62 = vmatprep.subr.mxu0 0.0
  %63 = vmatpush1.msra.mxu0 %v27
  %64 = vmatprep.subr.mxu0 0.0
  %65 = vmatpush1.msra.mxu0 %v28
  %66 = vmatprep.subr.mxu0 0.0
  %67 = vmatpush1.msra.mxu0 %v29
  %68 = vmatprep.subr.mxu0 0.0
  %69 = vmatpush1.msra.mxu0 %v30
  %70 = vmatprep.subr.mxu0 0.0
  %71 = vmatpush1.msra.mxu0 0.0
  %72 = vmatprep.subr.mxu0 0.0
  %73 = vmatpush1.msra.mxu0 0.0
  %74 = vmatprep.subr.mxu0 0.0
  %75 = vmatpush1.msra.mxu0 0.0
  %76 = vmatprep.subr.mxu0 0.0
  %77 = vmatpush1.msra.mxu0 0.0
  %78 = vmatprep.subr.mxu0 0.0
  %79 = vmatpush1.msra.mxu0 0.0
  %80 = vmatprep.subr.mxu0 0.0
  %81 = vmatpush1.msra.mxu0 0.0
  %82 = vmatprep.subr.mxu0 0.0
  %83 = vmatpush1.msra.mxu0 0.0
  %84 = vmatprep.subr.mxu0 0.0
  %85 = vmatpush1.msra.mxu0 0.0
  %86 = vmatprep.subr.mxu0 0.0
  %87 = vmatpush1.msra.mxu0 0.0
  %88 = vmatprep.subr.mxu0 0.0
  %89 = vmatpush1.msra.mxu0 0.0
  %90 = vmatprep.subr.mxu0 0.0
  %91 = vmatpush1.msra.mxu0 0.0
  %92 = vmatprep.subr.mxu0 0.0
  %93 = vmatpush1.msra.mxu0 0.0
  %94 = vmatprep.subr.mxu0 0.0
  %95 = vmatpush1.msra.mxu0 0.0
  %96 = vmatprep.subr.mxu0 0.0
  %97 = vmatpush1.msra.mxu0 0.0
  %98 = vmatprep.subr.mxu0 0.0
  %99 = vmatpush1.msra.mxu0 0.0
  %100 = vmatprep.subr.mxu0 0.0
  %101 = vmatpush1.msra.mxu0 0.0
  %102 = vmatprep.mubr.f32.mxu0 0.0
  %103 = vmatmul.mubr.f32.gmra.mrb[0].mxu0 %v14
  %v104 = vpop.f32.mrb[0].mxu0
  %v105 = vadd.f32 %v36, %v104
  %v106 = vpop.f32.mrb[0].mxu0
  %107 = vdwg.mxu0
  %108 = vst [vmem:[%s3] sm:$0xff] %v105
  // Predicated region
  $region14: #{cnn_forward.13} parent=0 // pred_check
    _
  $region15: #{cnn_forward.13} parent=0 // pred_check_branch
    %110 = sbr.rel (0) target = $region17
  $region16: #{cnn_forward.13} parent=0 // pred_region
    _
  $region17: #{cnn_forward.13} parent=0 // pred_fallthru
    _
  // Predicated region
  $region18: #{cnn_forward.13} parent=0 // pred_check
    _
  $region19: #{cnn_forward.13} parent=0 // pred_check_branch
    %112 = sbr.rel (0) target = $region21
  $region20: #{cnn_forward.13} parent=0 // pred_region
    _
  $region21: #{cnn_forward.13} parent=0 // pred_fallthru
    _

</llo_original>
